<compile_context>
chip_gen: v7x
topology: tpu7x:2x2x1
jax: 0.10.0
libtpu: 0.0.40
codegen_flags: <defaults>
</compile_context>

<pallas_src>
import jax
import jax.numpy as jnp
import numpy as np
from jax.experimental import pallas as pl
from jax.experimental.pallas import tpu as pltpu

LN_EPS = 1e-5      # nn.LayerNorm default
BN_EPS = 1e-5      # nn.BatchNorm1d default
NORM_EPS = 1e-12   # F.normalize default


# ----------------------------------------------------------------------------- helpers
def _round_up(x, m):
    return ((x + m - 1) // m) * m


def _tpu_vmem_capacity():
    try:
        return int(pltpu.get_tpu_info().vmem_capacity_bytes)
    except Exception:
        return 64 * 1024 * 1024          # conservative fallback (v7x-class per-core VMEM)


_VMEM_CAP = _tpu_vmem_capacity()
_IS_SMALL_VMEM = _VMEM_CAP <= 80 * 1024 * 1024       # v7x-class: 64 MiB VMEM, 2 TCs
_DEFAULT_TILE_B = 128 if _IS_SMALL_VMEM else 256     # 128-MiB parts take bigger batch tiles
_MIN_GRID_STEPS = 2 if _IS_SMALL_VMEM else 1         # v7x: >=2 grid steps -> both TCs busy


def _vmem_limit(need_bytes):
    """Explicit scoped-VMEM budget: generous, clamped below physical capacity."""
    cap = int(0.85 * _VMEM_CAP)
    return int(min(cap, max(32 * 1024 * 1024, int(need_bytes))))


def _choose_batch(b, tile_b, *, lane_multiple=8, min_steps=1):
    """Padded batch + tile.  Tile is a multiple of 8 (sublane) that divides the padded
    batch; the padded batch is a multiple of `lane_multiple` (128 for lane-dense sim
    columns).  If min_steps > 1, shrink the tile so the grid has >= min_steps steps."""
    bp = _round_up(max(int(b), 1), max(8, int(lane_multiple)))
    t = max(8, (min(int(tile_b), bp) // 8) * 8)
    while bp % t:
        t -= 8
    if min_steps > 1 and bp // t < min_steps and bp >= 8 * min_steps:
        t = max(8, (bp // min_steps // 8) * 8)
        while bp % t:
            t -= 8
    return bp, t


def _gelu(x):
    # TODO(synk): nn.GELU() default is exact erf-based; tanh approximation used for
    # robust Mosaic lowering (erf primitive availability varies across toolchains).
    c = 0.7978845608028654  # sqrt(2/pi)
    return 0.5 * x * (1.0 + jnp.tanh(c * (x + 0.044715 * x * x * x)))


def _const_spec(shape, buffered):
    """BlockSpec for a block that is identical at every grid step (constant index_map)."""
    idx = lambda i: (0,) * len(shape)
    if buffered:
        return pl.BlockSpec(shape, idx, pipeline_mode=pl.Buffered(1))
    return pl.BlockSpec(shape, idx)


# ----------------------------------------------------------------------------- kernels
def _mlp_block(x, w1_ref, vec_ref, w2_ref, b2_ref):
    """Linear1 -> LayerNorm -> GELU -> Linear2 (+folded eval-mode BatchNorm)."""
    vecs = vec_ref[...]                  # [3, D]  f32 : b1 / ln_gamma / ln_beta
    b1, ln_g, ln_b = vecs[0:1, :], vecs[1:2, :], vecs[2:3, :]

    # Linear1 : bf16 operands on the MXU, f32 accumulation.
    h = jnp.dot(x.astype(jnp.bfloat16), w1_ref[...],
                preferred_element_type=jnp.float32) + b1

    # LayerNorm : center once, reuse for variance and normalization.
    mu = jnp.mean(h, axis=-1, keepdims=True)
    d = h - mu
    var = jnp.mean(d * d, axis=-1, keepdims=True)
    h = d * jax.lax.rsqrt(var + LN_EPS) * ln_g + ln_b

    # GELU (f32 on VPU/EUP)
    h = _gelu(h)

    # Linear2 with eval-mode BatchNorm folded into (w2', b2').
    return jnp.dot(h.astype(jnp.bfloat16), w2_ref[...],
                   preferred_element_type=jnp.float32) + b2_ref[...]


def text_head_kernel(x_ref, w1_ref, vec_ref, w2_ref, b2_ref, proj_ref, norm_ref):
    """Text projection head: projection (f32) + L2-normalized embeddings (bf16)."""
    z = _mlp_block(x_ref[...], w1_ref, vec_ref, w2_ref, b2_ref)
    proj_ref[...] = z
    # F.normalize(p=2, dim=1): x / max(||x||, eps)  ==  x * rsqrt(max(||x||^2, eps^2))
    ss = jnp.sum(z * z, axis=-1, keepdims=True)
    norm_ref[...] = (z * jax.lax.rsqrt(jnp.maximum(ss, NORM_EPS * NORM_EPS))
                     ).astype(jnp.bfloat16)


def vision_head_sim_kernel(scale_ref, x_ref, w1_ref, vec_ref, w2_ref, b2_ref, tn_ref,
                           proj_ref, sim_ref):
    """Vision projection head with the CLIP similarity matmul fused in.
    The pre-clamped logit scale is folded into the (tb, P) normalized LHS tile."""
    z = _mlp_block(x_ref[...], w1_ref, vec_ref, w2_ref, b2_ref)
    proj_ref[...] = z
    ss = jnp.sum(z * z, axis=-1, keepdims=True)
    inv = jax.lax.rsqrt(jnp.maximum(ss, NORM_EPS * NORM_EPS))
    vn = (z * (inv * scale_ref[0, 0])).astype(jnp.bfloat16)
    # Contract the last dims (no explicit transpose): sim = scale * vn @ tn.T
    sim_ref[...] = jax.lax.dot_general(
        vn, tn_ref[...],
        dimension_numbers=(((1,), (1,)), ((), ())),
        preferred_element_type=jnp.float32)


# ----------------------------------------------------------------------------- wrappers
def _run_text_head(feat, w1, vecs, w2, b2, tb):
    Bp, D = feat.shape
    Pp = w2.shape[1]
    grid = (Bp // tb,)

    need = (2 * tb * D * 4                        # double-buffered input tile
            + 2 * (D * D + D * Pp) * 2            # bf16 weights (worst case 2 buffers)
            + 2 * (3 * D + Pp) * 4                # packed vectors + folded bias
            + 2 * tb * Pp * 4 + 2 * tb * Pp * 2   # proj (f32) + norm (bf16) tiles
            + 5 * tb * D * 4)                     # f32 intermediates (h, d, GELU temps)

    def call(buffered_const):
        return pl.pallas_call(
            text_head_kernel,
            grid=grid,
            in_specs=[
                pl.BlockSpec((tb, D), lambda i: (i, 0)),      # feature batch tile
                _const_spec((D, D), buffered_const),          # w1 (resident, bf16)
                _const_spec((3, D), buffered_const),          # packed b1/ln_g/ln_b
                _const_spec((D, Pp), buffered_const),         # w2' (BN folded, bf16)
                _const_spec((1, Pp), buffered_const),         # b2' (BN folded)
            ],
            out_specs=(pl.BlockSpec((tb, Pp), lambda i: (i, 0)),
                       pl.BlockSpec((tb, Pp), lambda i: (i, 0))),
            out_shape=(jax.ShapeDtypeStruct((Bp, Pp), jnp.float32),
                       jax.ShapeDtypeStruct((Bp, Pp), jnp.bfloat16)),
            compiler_params=pltpu.CompilerParams(
                dimension_semantics=("parallel",),
                vmem_limit_bytes=_vmem_limit(need)),
            cost_estimate=pl.CostEstimate(
                flops=int(2 * Bp * D * (D + Pp)),
                transcendentals=int(Bp * D),
                bytes_accessed=int(Bp * D * 4 + (D * D + D * Pp) * 2
                                   + (3 * D + Pp) * 4 + Bp * Pp * 6)),
        )(feat, w1, vecs, w2, b2)

    try:
        return call(True)       # Buffered(1): constant blocks keep a single VMEM buffer
    except Exception:
        return call(False)      # fallback if pipeline_mode / Buffered(1) unsupported


def _run_vision_head_sim(scale, feat, w1, vecs, w2, b2, tnorm, tb):
    Bp, D = feat.shape
    Pp = w2.shape[1]
    Btp = tnorm.shape[0]
    grid = (Bp // tb,)

    need = (2 * tb * D * 4
            + 2 * (D * D + D * Pp) * 2
            + 2 * (3 * D + Pp) * 4
            + 2 * Btp * Pp * 2                     # resident text-norm (bf16)
            + 2 * tb * Pp * 4 + 2 * tb * Btp * 4   # proj + sim output tiles
            + 5 * tb * D * 4)

    def call(buffered_const):
        return pl.pallas_call(
            vision_head_sim_kernel,
            grid=grid,
            in_specs=[
                pl.BlockSpec(memory_space=pltpu.MemorySpace.SMEM),  # pre-clamped scale
                pl.BlockSpec((tb, D), lambda i: (i, 0)),            # feature batch tile
                _const_spec((D, D), buffered_const),                # w1
                _const_spec((3, D), buffered_const),                # packed b1/ln_g/ln_b
                _const_spec((D, Pp), buffered_const),               # w2'
                _const_spec((1, Pp), buffered_const),               # b2'
                _const_spec((Btp, Pp), buffered_const),             # text-norm (bf16)
            ],
            out_specs=(pl.BlockSpec((tb, Pp), lambda i: (i, 0)),
                       pl.BlockSpec((tb, Btp), lambda i: (i, 0))),
            out_shape=(jax.ShapeDtypeStruct((Bp, Pp), jnp.float32),
                       jax.ShapeDtypeStruct((Bp, Btp), jnp.float32)),
            compiler_params=pltpu.CompilerParams(
                dimension_semantics=("parallel",),
                vmem_limit_bytes=_vmem_limit(need)),
            cost_estimate=pl.CostEstimate(
                flops=int(2 * Bp * D * (D + Pp) + 2 * Bp * Btp * Pp),
                transcendentals=int(Bp * D),
                bytes_accessed=int(Bp * D * 4 + (D * D + D * Pp) * 2 + (3 * D + Pp) * 4
                                   + Btp * Pp * 2 + Bp * (Pp + Btp) * 4)),
        )(scale, feat, w1, vecs, w2, b2, tnorm)

    try:
        return call(True)
    except Exception:
        return call(False)


def _prep_head(params, prefix, p_pad):
    """Fold eval-mode BatchNorm into Linear2, pack small vectors, pre-cast MXU weights,
    and zero-pad the projection dim to a lane-dense multiple of 128."""
    w1 = params[f"{prefix}_w1"]                                   # [D, D]
    w2 = params[f"{prefix}_w2"]                                   # [D, P]
    s = params[f"{prefix}_bn_g"] * jax.lax.rsqrt(params[f"{prefix}_bn_v"] + BN_EPS)
    w2f = w2 * s
    b2f = (params[f"{prefix}_b2"] - params[f"{prefix}_bn_m"]) * s + params[f"{prefix}_bn_b"]
    P = w2.shape[1]
    if p_pad > P:                          # zero columns -> zero padded outputs
        w2f = jnp.pad(w2f, ((0, 0), (0, p_pad - P)))
        b2f = jnp.pad(b2f, ((0, 0), (0, p_pad - P)))
    vecs = jnp.concatenate([params[f"{prefix}_b1"],
                            params[f"{prefix}_ln_g"],
                            params[f"{prefix}_ln_b"]], axis=0)    # [3, D]
    return (w1.astype(jnp.bfloat16), vecs,
            w2f.astype(jnp.bfloat16), b2f.astype(jnp.float32))


def dual_encoder_forward(images, text_data, params, *, tile_b=None):
    if tile_b is None:
        tile_b = _DEFAULT_TILE_B

    # --- backbone stand-ins (glue, not part of DualEncoder's own params) ---
    vis_feat = jnp.mean(images, axis=(2, 3)) @ params["vision_backbone_w"]   # [B, Dv]
    txt_feat = text_data[:, 0, :]                                            # [B, Dt] (CLS)
    B = vis_feat.shape[0]
    P = params["v_w2"].shape[1]
    Pp = _round_up(P, 128)               # lane-dense projection / normalized outputs

    # Batch padding/tiling.  Text batch padded to a 128 multiple -> lane-dense sim cols.
    Bvp, tbv = _choose_batch(B, tile_b, lane_multiple=8, min_steps=_MIN_GRID_STEPS)
    Btp, tbt = _choose_batch(B, tile_b, lane_multiple=128, min_steps=_MIN_GRID_STEPS)
    vis_feat = jnp.pad(vis_feat, ((0, Bvp - B), (0, 0)))
    txt_feat = jnp.pad(txt_feat, ((0, Btp - B), (0, 0)))

    vw1, vvecs, vw2, vb2 = _prep_head(params, "v", Pp)
    tw1, tvecs, tw2, tb2f = _prep_head(params, "t", Pp)

    # Text head first: projection (f32) + L2-normalized bf16 embeddings.
    tproj_p, tnorm_p = _run_text_head(txt_feat, tw1, tvecs, tw2, tb2f, tbt)

    # clamp(exp(logit_scale), 1, 100) computed once; folded into the vision-side LHS.
    scale = jnp.clip(jnp.exp(params["logit_scale"]), 1.0, 100.0).reshape(1, 1)
    scale = scale.astype(jnp.float32)

    # Vision head with the similarity matmul fused in (no vnorm HBM round trip).
    vproj_p, sim_p = _run_vision_head_sim(scale, vis_feat, vw1, vvecs, vw2, vb2,
                                          tnorm_p, tbv)

    return {"vision_features": vproj_p[:B, :P],
            "text_features": tproj_p[:B, :P],
            "similarity": sim_p[:B, :B]}


# ----------------------------------------------------------------------------- params
def _orthogonal(key, out_dim, in_dim, gain=1.2):
    """Deterministic orthogonal init a la nn.init.orthogonal_(gain=1.2)."""
    rows, cols = (out_dim, in_dim) if out_dim >= in_dim else (in_dim, out_dim)
    a = jax.random.normal(key, (rows, cols), jnp.float32)
    q, r = jnp.linalg.qr(a)
    q = q * jnp.sign(jnp.diag(r))        # sign fix (as torch does)
    w = q if out_dim >= in_dim else q.T  # -> [out_dim, in_dim]
    return (gain * w).astype(jnp.float32)


def _head_params(key, d_in, d_proj, prefix):
    k1, k2 = jax.random.split(key)
    w1 = _orthogonal(k1, d_in, d_in)       # torch Linear weight [out, in]
    w2 = _orthogonal(k2, d_proj, d_in)
    return {
        f"{prefix}_w1": w1.T,                               # kernel wants [in, out]
        f"{prefix}_b1": jnp.zeros((1, d_in), jnp.float32),
        f"{prefix}_ln_g": jnp.ones((1, d_in), jnp.float32),
        f"{prefix}_ln_b": jnp.zeros((1, d_in), jnp.float32),
        f"{prefix}_w2": w2.T,
        f"{prefix}_b2": jnp.zeros((1, d_proj), jnp.float32),
        f"{prefix}_bn_g": jnp.ones((1, d_proj), jnp.float32),
        f"{prefix}_bn_b": jnp.zeros((1, d_proj), jnp.float32),
        f"{prefix}_bn_m": jnp.zeros((1, d_proj), jnp.float32),   # running_mean
        f"{prefix}_bn_v": jnp.ones((1, d_proj), jnp.float32),    # running_var
    }


def init_params(key, c_in, vision_dim, text_dim, projection_dim):
    kb, kv, kt = jax.random.split(key, 3)
    params = {
        "vision_backbone_w": 0.1 * jax.random.normal(kb, (c_in, vision_dim), jnp.float32),
        "logit_scale": jnp.full((1, 1), np.log(1.0 / 0.07), jnp.float32),
    }
    params.update(_head_params(kv, vision_dim, projection_dim, "v"))
    params.update(_head_params(kt, text_dim, projection_dim, "t"))
    return params


if __name__ == "__main__":
    key = jax.random.PRNGKey(0)
    B, C, H, W = 16, 4, 16, 16
    S = 8
    Dv, Dt, P = 64, 48, 32   # vision_dim, text_dim, projection_dim (small synthetic sizes)

    k_img, k_txt, k_par = jax.random.split(key, 3)
    images = jax.random.normal(k_img, (B, C, H, W), jnp.float32)
    text_data = jax.random.normal(k_txt, (B, S, Dt), jnp.float32)
    params = init_params(k_par, C, Dv, Dt, P)

    # tile_b=8 exercises a multi-step pipelined grid at this toy size; at real CLIP
    # sizes the generation-aware default (128 on v7x, 256 on v5e/v6e) is used instead.
    out = dual_encoder_forward(images, text_data, params, tile_b=8)
    jax.block_until_ready(out)
    assert out["vision_features"].shape == (B, P)
    assert out["text_features"].shape == (B, P)
    assert out["similarity"].shape == (B, B)
    print("KERNEL_OK")
</pallas_src>

<mosaic_0001>
module attributes {stable_mosaic.version = 11 : i64} {
  func.func @text_head_kernel(%arg0: i32, %arg1: memref<8x48xf32, #tpu.memory_space<vmem>>, %arg2: memref<48x48xbf16, #tpu.memory_space<vmem>>, %arg3: memref<3x48xf32, #tpu.memory_space<vmem>>, %arg4: memref<48x128xbf16, #tpu.memory_space<vmem>>, %arg5: memref<1x128xf32, #tpu.memory_space<vmem>>, %arg6: memref<8x128xf32, #tpu.memory_space<vmem>>, %arg7: memref<8x128xbf16, #tpu.memory_space<vmem>>) attributes {dimension_semantics = [#tpu.dimension_semantics<parallel>], iteration_bounds = array<i64: 16>, scalar_prefetch = 0 : i64, scratch_operands = 0 : i64, tpu.core_type = #tpu.core_type<tc>, window_params = [{transform_indices = @transform_0, window_bounds = array<i64: 8, 48>}, {pipeline_mode = #tpu.pipeline_mode<synchronous>, transform_indices = @transform_1, window_bounds = array<i64: 48, 48>}, {pipeline_mode = #tpu.pipeline_mode<synchronous>, transform_indices = @transform_2, window_bounds = array<i64: 3, 48>}, {pipeline_mode = #tpu.pipeline_mode<synchronous>, transform_indices = @transform_3, window_bounds = array<i64: 48, 128>}, {pipeline_mode = #tpu.pipeline_mode<synchronous>, transform_indices = @transform_4, window_bounds = array<i64: 1, 128>}, {transform_indices = @transform_5, window_bounds = array<i64: 8, 128>}, {transform_indices = @transform_6, window_bounds = array<i64: 8, 128>}]} {
    %c0 = arith.constant 0 : index
    %c0_0 = arith.constant 0 : index
    %0 = vector.load %arg1[%c0, %c0_0] : memref<8x48xf32, #tpu.memory_space<vmem>>, vector<8x48xf32>
    %c0_1 = arith.constant 0 : index
    %c0_2 = arith.constant 0 : index
    %1 = vector.load %arg3[%c0_1, %c0_2] : memref<3x48xf32, #tpu.memory_space<vmem>>, vector<3x48xf32>
    %2 = vector.extract_strided_slice %1 {offsets = [0, 0], sizes = [1, 48], strides = [1, 1]} : vector<3x48xf32> to vector<1x48xf32>
    %3 = vector.extract_strided_slice %1 {offsets = [1, 0], sizes = [1, 48], strides = [1, 1]} : vector<3x48xf32> to vector<1x48xf32>
    %4 = vector.extract_strided_slice %1 {offsets = [2, 0], sizes = [1, 48], strides = [1, 1]} : vector<3x48xf32> to vector<1x48xf32>
    %5 = arith.truncf %0 : vector<8x48xf32> to vector<8x48xbf16>
    %c0_3 = arith.constant 0 : index
    %c0_4 = arith.constant 0 : index
    %6 = vector.load %arg2[%c0_3, %c0_4] : memref<48x48xbf16, #tpu.memory_space<vmem>>, vector<48x48xbf16>
    %cst = arith.constant dense<0.000000e+00> : vector<8x48xf32>
    %7 = tpu.matmul %5, %6, %cst {dimension_numbers = #tpu.dot_dimension_numbers<[1], [0], [0], [1], [0, 0, 1, 1], [], []>} : vector<8x48xbf16>, vector<48x48xbf16>, vector<8x48xf32> -> vector<8x48xf32>
    %8 = vector.broadcast %2 : vector<1x48xf32> to vector<8x48xf32>
    %9 = arith.addf %7, %8 : vector<8x48xf32>
    %cst_5 = arith.constant dense<0.000000e+00> : vector<8xf32>
    %10 = vector.multi_reduction <add>, %9, %cst_5 [1] : vector<8x48xf32> to vector<8xf32>
    %11 = vector.shape_cast %10 : vector<8xf32> to vector<8x1xf32>
    %cst_6 = arith.constant 4.800000e+01 : f32
    %12 = vector.broadcast %cst_6 : f32 to vector<8x1xf32>
    %13 = arith.divf %11, %12 : vector<8x1xf32>
    %14 = vector.broadcast %13 : vector<8x1xf32> to vector<8x48xf32>
    %15 = arith.subf %9, %14 : vector<8x48xf32>
    %16 = arith.mulf %15, %15 : vector<8x48xf32>
    %cst_7 = arith.constant dense<0.000000e+00> : vector<8xf32>
    %17 = vector.multi_reduction <add>, %16, %cst_7 [1] : vector<8x48xf32> to vector<8xf32>
    %18 = vector.shape_cast %17 : vector<8xf32> to vector<8x1xf32>
    %cst_8 = arith.constant 4.800000e+01 : f32
    %19 = vector.broadcast %cst_8 : f32 to vector<8x1xf32>
    %20 = arith.divf %18, %19 : vector<8x1xf32>
    %cst_9 = arith.constant 9.99999974E-6 : f32
    %21 = vector.broadcast %cst_9 : f32 to vector<8x1xf32>
    %22 = arith.addf %20, %21 : vector<8x1xf32>
    %23 = math.rsqrt %22 : vector<8x1xf32>
    %24 = vector.broadcast %23 : vector<8x1xf32> to vector<8x48xf32>
    %25 = arith.mulf %15, %24 : vector<8x48xf32>
    %26 = vector.broadcast %3 : vector<1x48xf32> to vector<8x48xf32>
    %27 = arith.mulf %25, %26 : vector<8x48xf32>
    %28 = vector.broadcast %4 : vector<1x48xf32> to vector<8x48xf32>
    %29 = arith.addf %27, %28 : vector<8x48xf32>
    %cst_10 = arith.constant 5.000000e-01 : f32
    %30 = vector.broadcast %cst_10 : f32 to vector<8x48xf32>
    %31 = arith.mulf %30, %29 : vector<8x48xf32>
    %cst_11 = arith.constant 4.471500e-02 : f32
    %32 = vector.broadcast %cst_11 : f32 to vector<8x48xf32>
    %33 = arith.mulf %32, %29 : vector<8x48xf32>
    %34 = arith.mulf %33, %29 : vector<8x48xf32>
    %35 = arith.mulf %34, %29 : vector<8x48xf32>
    %36 = arith.addf %29, %35 : vector<8x48xf32>
    %cst_12 = arith.constant 0.797884583 : f32
    %37 = vector.broadcast %cst_12 : f32 to vector<8x48xf32>
    %38 = arith.mulf %37, %36 : vector<8x48xf32>
    %39 = math.tanh %38 : vector<8x48xf32>
    %cst_13 = arith.constant 1.000000e+00 : f32
    %40 = vector.broadcast %cst_13 : f32 to vector<8x48xf32>
    %41 = arith.addf %40, %39 : vector<8x48xf32>
    %42 = arith.mulf %31, %41 : vector<8x48xf32>
    %43 = arith.truncf %42 : vector<8x48xf32> to vector<8x48xbf16>
    %c0_14 = arith.constant 0 : index
    %c0_15 = arith.constant 0 : index
    %44 = vector.load %arg4[%c0_14, %c0_15] : memref<48x128xbf16, #tpu.memory_space<vmem>>, vector<48x128xbf16>
    %cst_16 = arith.constant dense<0.000000e+00> : vector<8x128xf32>
    %45 = tpu.matmul %43, %44, %cst_16 {dimension_numbers = #tpu.dot_dimension_numbers<[1], [0], [0], [1], [0, 0, 1, 1], [], []>} : vector<8x48xbf16>, vector<48x128xbf16>, vector<8x128xf32> -> vector<8x128xf32>
    %c0_17 = arith.constant 0 : index
    %c0_18 = arith.constant 0 : index
    %46 = vector.load %arg5[%c0_17, %c0_18] : memref<1x128xf32, #tpu.memory_space<vmem>>, vector<1x128xf32>
    %47 = vector.broadcast %46 : vector<1x128xf32> to vector<8x128xf32>
    %48 = arith.addf %45, %47 : vector<8x128xf32>
    %c0_19 = arith.constant 0 : index
    %c0_20 = arith.constant 0 : index
    %49 = vector.load %arg6[%c0_19, %c0_20] : memref<8x128xf32, #tpu.memory_space<vmem>>, vector<8x128xf32>
    tpu.vector_store %arg6[%c0_19, %c0_20], %48 {strides = array<i32>} : memref<8x128xf32, #tpu.memory_space<vmem>>, vector<8x128xf32>,
    %50 = arith.mulf %48, %48 : vector<8x128xf32>
    %cst_21 = arith.constant dense<0.000000e+00> : vector<8xf32>
    %51 = vector.multi_reduction <add>, %50, %cst_21 [1] : vector<8x128xf32> to vector<8xf32>
    %52 = vector.shape_cast %51 : vector<8xf32> to vector<8x1xf32>
    %cst_22 = arith.constant 1.000000e-24 : f32
    %53 = vector.broadcast %cst_22 : f32 to vector<8x1xf32>
    %54 = arith.maximumf %52, %53 : vector<8x1xf32>
    %55 = math.rsqrt %54 : vector<8x1xf32>
    %56 = vector.broadcast %55 : vector<8x1xf32> to vector<8x128xf32>
    %57 = arith.mulf %48, %56 : vector<8x128xf32>
    %58 = arith.truncf %57 : vector<8x128xf32> to vector<8x128xbf16>
    %c0_23 = arith.constant 0 : index
    %c0_24 = arith.constant 0 : index
    %59 = vector.load %arg7[%c0_23, %c0_24] : memref<8x128xbf16, #tpu.memory_space<vmem>>, vector<8x128xbf16>
    tpu.vector_store %arg7[%c0_23, %c0_24], %58 {strides = array<i32>} : memref<8x128xbf16, #tpu.memory_space<vmem>>, vector<8x128xbf16>,
    return
  }
  func.func @transform_0(%arg0: i32) -> (i32, i32) {
    %c0_i32 = arith.constant 0 : i32
    %c0_i32_0 = arith.constant 0 : i32
    return %arg0, %c0_i32 : i32, i32
  }
  func.func @transform_1(%arg0: i32) -> (i32, i32) {
    %c0_i32 = arith.constant 0 : i32
    %c0_i32_0 = arith.constant 0 : i32
    %c0_i32_1 = arith.constant 0 : i32
    return %c0_i32, %c0_i32_0 : i32, i32
  }
  func.func @transform_2(%arg0: i32) -> (i32, i32) {
    %c0_i32 = arith.constant 0 : i32
    %c0_i32_0 = arith.constant 0 : i32
    %c0_i32_1 = arith.constant 0 : i32
    return %c0_i32, %c0_i32_0 : i32, i32
  }
  func.func @transform_3(%arg0: i32) -> (i32, i32) {
    %c0_i32 = arith.constant 0 : i32
    %c0_i32_0 = arith.constant 0 : i32
    %c0_i32_1 = arith.constant 0 : i32
    return %c0_i32, %c0_i32_0 : i32, i32
  }
  func.func @transform_4(%arg0: i32) -> (i32, i32) {
    %c0_i32 = arith.constant 0 : i32
    %c0_i32_0 = arith.constant 0 : i32
    %c0_i32_1 = arith.constant 0 : i32
    return %c0_i32, %c0_i32_0 : i32, i32
  }
  func.func @transform_5(%arg0: i32) -> (i32, i32) {
    %c0_i32 = arith.constant 0 : i32
    %c0_i32_0 = arith.constant 0 : i32
    return %arg0, %c0_i32 : i32, i32
  }
  func.func @transform_6(%arg0: i32) -> (i32, i32) {
    %c0_i32 = arith.constant 0 : i32
    %c0_i32_0 = arith.constant 0 : i32
    return %arg0, %c0_i32 : i32, i32
  }
}

module attributes {stable_mosaic.version = 11 : i64} {
  func.func @text_head_kernel(%arg0: i32, %arg1: memref<8x48xf32, #tpu.memory_space<vmem>>, %arg2: memref<48x48xbf16, #tpu.memory_space<vmem>>, %arg3: memref<3x48xf32, #tpu.memory_space<vmem>>, %arg4: memref<48x128xbf16, #tpu.memory_space<vmem>>, %arg5: memref<1x128xf32, #tpu.memory_space<vmem>>, %arg6: memref<8x128xf32, #tpu.memory_space<vmem>>, %arg7: memref<8x128xbf16, #tpu.memory_space<vmem>>) attributes {dimension_semantics = [#tpu.dimension_semantics<parallel>], iteration_bounds = array<i64: 16>, scalar_prefetch = 0 : i64, scratch_operands = 0 : i64, tpu.core_type = #tpu.core_type<tc>, window_params = [{transform_indices = @transform_0, window_bounds = array<i64: 8, 48>}, {pipeline_mode = #tpu.pipeline_mode<synchronous>, transform_indices = @transform_1, window_bounds = array<i64: 48, 48>}, {pipeline_mode = #tpu.pipeline_mode<synchronous>, transform_indices = @transform_2, window_bounds = array<i64: 3, 48>}, {pipeline_mode = #tpu.pipeline_mode<synchronous>, transform_indices = @transform_3, window_bounds = array<i64: 48, 128>}, {pipeline_mode = #tpu.pipeline_mode<synchronous>, transform_indices = @transform_4, window_bounds = array<i64: 1, 128>}, {transform_indices = @transform_5, window_bounds = array<i64: 8, 128>}, {transform_indices = @transform_6, window_bounds = array<i64: 8, 128>}]} {
    %c0 = arith.constant 0 : index
    %c0_0 = arith.constant 0 : index
    %0 = vector.load %arg1[%c0, %c0_0] : memref<8x48xf32, #tpu.memory_space<vmem>>, vector<8x48xf32>
    %c0_1 = arith.constant 0 : index
    %c0_2 = arith.constant 0 : index
    %1 = vector.load %arg3[%c0_1, %c0_2] : memref<3x48xf32, #tpu.memory_space<vmem>>, vector<3x48xf32>
    %2 = vector.extract_strided_slice %1 {offsets = [0, 0], sizes = [1, 48], strides = [1, 1]} : vector<3x48xf32> to vector<1x48xf32>
    %3 = vector.extract_strided_slice %1 {offsets = [1, 0], sizes = [1, 48], strides = [1, 1]} : vector<3x48xf32> to vector<1x48xf32>
    %4 = vector.extract_strided_slice %1 {offsets = [2, 0], sizes = [1, 48], strides = [1, 1]} : vector<3x48xf32> to vector<1x48xf32>
    %5 = arith.truncf %0 : vector<8x48xf32> to vector<8x48xbf16>
    %c0_3 = arith.constant 0 : index
    %c0_4 = arith.constant 0 : index
    %6 = vector.load %arg2[%c0_3, %c0_4] : memref<48x48xbf16, #tpu.memory_space<vmem>>, vector<48x48xbf16>
    %cst = arith.constant dense<0.000000e+00> : vector<8x48xf32>
    %7 = tpu.matmul %5, %6, %cst {dimension_numbers = #tpu.dot_dimension_numbers<[1], [0], [0], [1], [0, 0, 1, 1], [], []>} : vector<8x48xbf16>, vector<48x48xbf16>, vector<8x48xf32> -> vector<8x48xf32>
    %8 = vector.broadcast %2 : vector<1x48xf32> to vector<8x48xf32>
    %9 = arith.addf %7, %8 : vector<8x48xf32>
    %cst_5 = arith.constant dense<0.000000e+00> : vector<8xf32>
    %10 = vector.multi_reduction <add>, %9, %cst_5 [1] : vector<8x48xf32> to vector<8xf32>
    %11 = vector.shape_cast %10 : vector<8xf32> to vector<8x1xf32>
    %cst_6 = arith.constant 4.800000e+01 : f32
    %12 = vector.broadcast %cst_6 : f32 to vector<8x1xf32>
    %13 = arith.divf %11, %12 : vector<8x1xf32>
    %14 = vector.broadcast %13 : vector<8x1xf32> to vector<8x48xf32>
    %15 = arith.subf %9, %14 : vector<8x48xf32>
    %16 = arith.mulf %15, %15 : vector<8x48xf32>
    %cst_7 = arith.constant dense<0.000000e+00> : vector<8xf32>
    %17 = vector.multi_reduction <add>, %16, %cst_7 [1] : vector<8x48xf32> to vector<8xf32>
    %18 = vector.shape_cast %17 : vector<8xf32> to vector<8x1xf32>
    %cst_8 = arith.constant 4.800000e+01 : f32
    %19 = vector.broadcast %cst_8 : f32 to vector<8x1xf32>
    %20 = arith.divf %18, %19 : vector<8x1xf32>
    %cst_9 = arith.constant 9.99999974E-6 : f32
    %21 = vector.broadcast %cst_9 : f32 to vector<8x1xf32>
    %22 = arith.addf %20, %21 : vector<8x1xf32>
    %23 = math.rsqrt %22 : vector<8x1xf32>
    %24 = vector.broadcast %23 : vector<8x1xf32> to vector<8x48xf32>
    %25 = arith.mulf %15, %24 : vector<8x48xf32>
    %26 = vector.broadcast %3 : vector<1x48xf32> to vector<8x48xf32>
    %27 = arith.mulf %25, %26 : vector<8x48xf32>
    %28 = vector.broadcast %4 : vector<1x48xf32> to vector<8x48xf32>
    %29 = arith.addf %27, %28 : vector<8x48xf32>
    %cst_10 = arith.constant 5.000000e-01 : f32
    %30 = vector.broadcast %cst_10 : f32 to vector<8x48xf32>
    %31 = arith.mulf %30, %29 : vector<8x48xf32>
    %cst_11 = arith.constant 4.471500e-02 : f32
    %32 = vector.broadcast %cst_11 : f32 to vector<8x48xf32>
    %33 = arith.mulf %32, %29 : vector<8x48xf32>
    %34 = arith.mulf %33, %29 : vector<8x48xf32>
    %35 = arith.mulf %34, %29 : vector<8x48xf32>
    %36 = arith.addf %29, %35 : vector<8x48xf32>
    %cst_12 = arith.constant 0.797884583 : f32
    %37 = vector.broadcast %cst_12 : f32 to vector<8x48xf32>
    %38 = arith.mulf %37, %36 : vector<8x48xf32>
    %39 = math.tanh %38 : vector<8x48xf32>
    %cst_13 = arith.constant 1.000000e+00 : f32
    %40 = vector.broadcast %cst_13 : f32 to vector<8x48xf32>
    %41 = arith.addf %40, %39 : vector<8x48xf32>
    %42 = arith.mulf %31, %41 : vector<8x48xf32>
    %43 = arith.truncf %42 : vector<8x48xf32> to vector<8x48xbf16>
    %c0_14 = arith.constant 0 : index
    %c0_15 = arith.constant 0 : index
    %44 = vector.load %arg4[%c0_14, %c0_15] : memref<48x128xbf16, #tpu.memory_space<vmem>>, vector<48x128xbf16>
    %cst_16 = arith.constant dense<0.000000e+00> : vector<8x128xf32>
    %45 = tpu.matmul %43, %44, %cst_16 {dimension_numbers = #tpu.dot_dimension_numbers<[1], [0], [0], [1], [0, 0, 1, 1], [], []>} : vector<8x48xbf16>, vector<48x128xbf16>, vector<8x128xf32> -> vector<8x128xf32>
    %c0_17 = arith.constant 0 : index
    %c0_18 = arith.constant 0 : index
    %46 = vector.load %arg5[%c0_17, %c0_18] : memref<1x128xf32, #tpu.memory_space<vmem>>, vector<1x128xf32>
    %47 = vector.broadcast %46 : vector<1x128xf32> to vector<8x128xf32>
    %48 = arith.addf %45, %47 : vector<8x128xf32>
    %c0_19 = arith.constant 0 : index
    %c0_20 = arith.constant 0 : index
    %49 = vector.load %arg6[%c0_19, %c0_20] : memref<8x128xf32, #tpu.memory_space<vmem>>, vector<8x128xf32>
    tpu.vector_store %arg6[%c0_19, %c0_20], %48 {strides = array<i32>} : memref<8x128xf32, #tpu.memory_space<vmem>>, vector<8x128xf32>,
    %50 = arith.mulf %48, %48 : vector<8x128xf32>
    %cst_21 = arith.constant dense<0.000000e+00> : vector<8xf32>
    %51 = vector.multi_reduction <add>, %50, %cst_21 [1] : vector<8x128xf32> to vector<8xf32>
    %52 = vector.shape_cast %51 : vector<8xf32> to vector<8x1xf32>
    %cst_22 = arith.constant 1.000000e-24 : f32
    %53 = vector.broadcast %cst_22 : f32 to vector<8x1xf32>
    %54 = arith.maximumf %52, %53 : vector<8x1xf32>
    %55 = math.rsqrt %54 : vector<8x1xf32>
    %56 = vector.broadcast %55 : vector<8x1xf32> to vector<8x128xf32>
    %57 = arith.mulf %48, %56 : vector<8x128xf32>
    %58 = arith.truncf %57 : vector<8x128xf32> to vector<8x128xbf16>
    %c0_23 = arith.constant 0 : index
    %c0_24 = arith.constant 0 : index
    %59 = vector.load %arg7[%c0_23, %c0_24] : memref<8x128xbf16, #tpu.memory_space<vmem>>, vector<8x128xbf16>
    tpu.vector_store %arg7[%c0_23, %c0_24], %58 {strides = array<i32>} : memref<8x128xbf16, #tpu.memory_space<vmem>>, vector<8x128xbf16>,
    return
  }
  func.func @transform_0(%arg0: i32) -> (i32, i32) {
    %c0_i32 = arith.constant 0 : i32
    %c0_i32_0 = arith.constant 0 : i32
    return %arg0, %c0_i32 : i32, i32
  }
  func.func @transform_1(%arg0: i32) -> (i32, i32) {
    %c0_i32 = arith.constant 0 : i32
    %c0_i32_0 = arith.constant 0 : i32
    %c0_i32_1 = arith.constant 0 : i32
    return %c0_i32, %c0_i32_0 : i32, i32
  }
  func.func @transform_2(%arg0: i32) -> (i32, i32) {
    %c0_i32 = arith.constant 0 : i32
    %c0_i32_0 = arith.constant 0 : i32
    %c0_i32_1 = arith.constant 0 : i32
    return %c0_i32, %c0_i32_0 : i32, i32
  }
  func.func @transform_3(%arg0: i32) -> (i32, i32) {
    %c0_i32 = arith.constant 0 : i32
    %c0_i32_0 = arith.constant 0 : i32
    %c0_i32_1 = arith.constant 0 : i32
    return %c0_i32, %c0_i32_0 : i32, i32
  }
  func.func @transform_4(%arg0: i32) -> (i32, i32) {
    %c0_i32 = arith.constant 0 : i32
    %c0_i32_0 = arith.constant 0 : i32
    %c0_i32_1 = arith.constant 0 : i32
    return %c0_i32, %c0_i32_0 : i32, i32
  }
  func.func @transform_5(%arg0: i32) -> (i32, i32) {
    %c0_i32 = arith.constant 0 : i32
    %c0_i32_0 = arith.constant 0 : i32
    return %arg0, %c0_i32 : i32, i32
  }
  func.func @transform_6(%arg0: i32) -> (i32, i32) {
    %c0_i32 = arith.constant 0 : i32
    %c0_i32_0 = arith.constant 0 : i32
    return %arg0, %c0_i32 : i32, i32
  }
}

</mosaic_0001>

<llo_original>
// kernel: tpu_custom_call.1
$region0: #{tpu_custom_call.1}
  #allocation0 [shape = 'u32[]', space=smem, size = 0x4, offset = 0x4, fixed_abs, tag = 'smem constant byte address 0x4 - core index']
  #allocation1 [shape = 'u32[144,128]{1,0:T(1,128)}', space=vmem, size = 0x12000, scoped, tag = 'internal scratch']
  %s0 = inlined_call_operand.vmem [shape: f32[128,48], index: 0, kind: input, shape index: {}]
  %s1 = inlined_call_operand.vmem [shape: bf16[48,48], index: 1, kind: input, shape index: {}]
  %s2 = inlined_call_operand.vmem [shape: f32[3,48], index: 2, kind: input, shape index: {}]
  %s3 = inlined_call_operand.vmem [shape: bf16[48,128], index: 3, kind: input, shape index: {}]
  %s4 = inlined_call_operand.vmem [shape: f32[1,128], index: 4, kind: input, shape index: {}]
  %s5 = inlined_call_operand.hbm [shape: f32[128,128], index: 5, kind: output, shape index: {0}]
  %s6 = inlined_call_operand.hbm [shape: bf16[128,128], index: 6, kind: output, shape index: {1}]
  %7 = xla_tuple %s5, %s6
  %s8 = sld [smem:[#allocation0]]
  $region61: #{tpu_custom_call.1} parent=0
    _
  %s10 = ssub.s32 1, %s8
  %s11 = scalar_select 0, %s10, %s8
  $region1: #{tpu_custom_call.1} parent=0
    #allocation2 [shape = 'u8[8192]{0}', space=vmem, size = 0x2000, scoped, tag = 'output window, operand 0']
    #allocation3 [shape = 's32[2]{0}', space=sflag, size = 0x8, scoped, tag = 'scoped memory for tpu_custom_call.1']
    #allocation4 [shape = 'u8[4096]{0}', space=vmem, size = 0x1000, scoped, tag = 'output window, operand 1']
    #allocation5 [shape = 's32[2]{0}', space=sflag, size = 0x8, scoped, tag = 'scoped memory for tpu_custom_call.1']
    %12 = vsyncpa [#allocation3], 0
    %s13 = scalar_lea.sflag [#allocation3], 1
    %14 = vsyncpa %s13, 0
    %15 = vsyncpa [#allocation5], 0
    %s16 = scalar_lea.sflag [#allocation5], 1
    %17 = vsyncpa %s16, 0
    loop: start=0, step=1, limit=18
    $region2: #{tpu_custom_call.1} parent=1 // loop_pre_header
      _
    $region3: #{tpu_custom_call.1} parent=1 // loop_header
      %s19 = sphi 0, %s23
      %p20 = scmp.ge.s32.totalorder %s19, 18
      %s29 = sphi 0, %s31
      %s32 = sphi 0, %s29
      %s33 = sphi 0, %s32
      %s49 = sphi 0, %s33
      %s53 = sphi 0, %s53
      %s55 = sphi 0, %s53
      %s56 = sphi 0, %s55
      %s70 = sphi 0, %s56
      %s74 = sphi 0, %s74
      %s76 = sphi 0, %s74
      %s77 = sphi 0, %s76
      %s91 = sphi 0, %s77
      %s95 = sphi 0, %s95
      %s97 = sphi 0, %s95
      %s98 = sphi 0, %s97
      %s112 = sphi 0, %s98
      %s116 = sphi 0, %s116
      %s118 = sphi 0, %s116
      %s119 = sphi 0, %s118
      %s133 = sphi 0, %s119
      %s139 = sphi 0, %s141
      %s142 = sphi 0, %s139
      %s143 = sphi 0, %s142
      %s159 = sphi 0, %s143
      %s165 = sphi 0, %s167
      %s168 = sphi 0, %s165
      %s169 = sphi 0, %s168
      %s185 = sphi 0, %s169
    $region4: #{tpu_custom_call.1} parent=1 // loop_header_branch
      %22 = sbr.rel (%p20) target = $region8
    $region5: #{tpu_custom_call.1} parent=1 // loop_body
      %s24 = ssub.s32 %s19, 1
      %s25 = ssub.s32 %s19, 2
      %s26 = sadd.s32 %s19, 1
      %s27 = ssub.s32 %s19, %s26
      %p28 = scmp.eq.s32.totalorder %s27, 0
      %s30 = sadd.s32 %s29, 1
      %s31 = scalar_select %p28, %s29, %s30
      %p34 = pneg %p28
      %p35 = scmp.eq.s32.totalorder %s19, 15
      %p36 = por %p34, %p35
      %p37 = scmp.ne.s32.totalorder %s29, %s32
      %p38 = scmp.eq.s32.totalorder %s19, 0
      %p39 = por %p37, %p38
      %p40 = scmp.ne.s32.totalorder %s29, %s32
      %p41 = scmp.eq.s32.totalorder %s24, 15
      %p42 = por %p40, %p41
      %p43 = scmp.ne.s32.totalorder %s32, %s33
      %p44 = scmp.eq.s32.totalorder %s24, 0
      %p45 = por %p43, %p44
      %p46 = scmp.ne.s32.totalorder %s32, %s33
      %p47 = scmp.eq.s32.totalorder %s25, 15
      %p48 = por %p46, %p47
      %p50 = scmp.ne.s32.totalorder %s33, %s49
      %p51 = scmp.eq.s32.totalorder %s25, 0
      %p52 = por %p50, %p51
      %s54 = sadd.s32 %s53, 1
      %p57 = scmp.eq.s32.totalorder %s19, 15
      %p58 = scmp.ne.s32.totalorder %s53, %s55
      %p59 = scmp.eq.s32.totalorder %s19, 0
      %p60 = por %p58, %p59
      %p61 = scmp.ne.s32.totalorder %s53, %s55
      %p62 = scmp.eq.s32.totalorder %s24, 15
      %p63 = por %p61, %p62
      %p64 = scmp.ne.s32.totalorder %s55, %s56
      %p65 = scmp.eq.s32.totalorder %s24, 0
      %p66 = por %p64, %p65
      %p67 = scmp.ne.s32.totalorder %s55, %s56
      %p68 = scmp.eq.s32.totalorder %s25, 15
      %p69 = por %p67, %p68
      %p71 = scmp.ne.s32.totalorder %s56, %s70
      %p72 = scmp.eq.s32.totalorder %s25, 0
      %p73 = por %p71, %p72
      %s75 = sadd.s32 %s74, 1
      %p78 = scmp.eq.s32.totalorder %s19, 15
      %p79 = scmp.ne.s32.totalorder %s74, %s76
      %p80 = scmp.eq.s32.totalorder %s19, 0
      %p81 = por %p79, %p80
      %p82 = scmp.ne.s32.totalorder %s74, %s76
      %p83 = scmp.eq.s32.totalorder %s24, 15
      %p84 = por %p82, %p83
      %p85 = scmp.ne.s32.totalorder %s76, %s77
      %p86 = scmp.eq.s32.totalorder %s24, 0
      %p87 = por %p85, %p86
      %p88 = scmp.ne.s32.totalorder %s76, %s77
      %p89 = scmp.eq.s32.totalorder %s25, 15
      %p90 = por %p88, %p89
      %p92 = scmp.ne.s32.totalorder %s77, %s91
      %p93 = scmp.eq.s32.totalorder %s25, 0
      %p94 = por %p92, %p93
      %s96 = sadd.s32 %s95, 1
      %p99 = scmp.eq.s32.totalorder %s19, 15
      %p100 = scmp.ne.s32.totalorder %s95, %s97
      %p101 = scmp.eq.s32.totalorder %s19, 0
      %p102 = por %p100, %p101
      %p103 = scmp.ne.s32.totalorder %s95, %s97
      %p104 = scmp.eq.s32.totalorder %s24, 15
      %p105 = por %p103, %p104
      %p106 = scmp.ne.s32.totalorder %s97, %s98
      %p107 = scmp.eq.s32.totalorder %s24, 0
      %p108 = por %p106, %p107
      %p109 = scmp.ne.s32.totalorder %s97, %s98
      %p110 = scmp.eq.s32.totalorder %s25, 15
      %p111 = por %p109, %p110
      %p113 = scmp.ne.s32.totalorder %s98, %s112
      %p114 = scmp.eq.s32.totalorder %s25, 0
      %p115 = por %p113, %p114
      %s117 = sadd.s32 %s116, 1
      %p120 = scmp.eq.s32.totalorder %s19, 15
      %p121 = scmp.ne.s32.totalorder %s116, %s118
      %p122 = scmp.eq.s32.totalorder %s19, 0
      %p123 = por %p121, %p122
      %p124 = scmp.ne.s32.totalorder %s116, %s118
      %p125 = scmp.eq.s32.totalorder %s24, 15
      %p126 = por %p124, %p125
      %p127 = scmp.ne.s32.totalorder %s118, %s119
      %p128 = scmp.eq.s32.totalorder %s24, 0
      %p129 = por %p127, %p128
      %p130 = scmp.ne.s32.totalorder %s118, %s119
      %p131 = scmp.eq.s32.totalorder %s25, 15
      %p132 = por %p130, %p131
      %p134 = scmp.ne.s32.totalorder %s119, %s133
      %p135 = scmp.eq.s32.totalorder %s25, 0
      %p136 = por %p134, %p135
      %s137 = ssub.s32 %s19, %s26
      %p138 = scmp.eq.s32.totalorder %s137, 0
      %s140 = sadd.s32 %s139, 1
      %s141 = scalar_select %p138, %s139, %s140
      %p144 = pneg %p138
      %p145 = scmp.eq.s32.totalorder %s19, 15
      %p146 = por %p144, %p145
      %p147 = scmp.ne.s32.totalorder %s139, %s142
      %p148 = scmp.eq.s32.totalorder %s19, 0
      %p149 = por %p147, %p148
      %p150 = scmp.ne.s32.totalorder %s139, %s142
      %p151 = scmp.eq.s32.totalorder %s24, 15
      %p152 = por %p150, %p151
      %p153 = scmp.ne.s32.totalorder %s142, %s143
      %p154 = scmp.eq.s32.totalorder %s24, 0
      %p155 = por %p153, %p154
      %p156 = scmp.ne.s32.totalorder %s142, %s143
      %p157 = scmp.eq.s32.totalorder %s25, 15
      %p158 = por %p156, %p157
      %p160 = scmp.ne.s32.totalorder %s143, %s159
      %p161 = scmp.eq.s32.totalorder %s25, 0
      %p162 = por %p160, %p161
      %s163 = ssub.s32 %s19, %s26
      %p164 = scmp.eq.s32.totalorder %s163, 0
      %s166 = sadd.s32 %s165, 1
      %s167 = scalar_select %p164, %s165, %s166
      %p170 = pneg %p164
      %p171 = scmp.eq.s32.totalorder %s19, 15
      %p172 = por %p170, %p171
      %p173 = scmp.ne.s32.totalorder %s165, %s168
      %p174 = scmp.eq.s32.totalorder %s19, 0
      %p175 = por %p173, %p174
      %p176 = scmp.ne.s32.totalorder %s165, %s168
      %p177 = scmp.eq.s32.totalorder %s24, 15
      %p178 = por %p176, %p177
      %p179 = scmp.ne.s32.totalorder %s168, %s169
      %p180 = scmp.eq.s32.totalorder %s24, 0
      %p181 = por %p179, %p180
      %p182 = scmp.ne.s32.totalorder %s168, %s169
      %p183 = scmp.eq.s32.totalorder %s25, 15
      %p184 = por %p182, %p183
      %p186 = scmp.ne.s32.totalorder %s169, %s185
      %p187 = scmp.eq.s32.totalorder %s25, 0
      %p188 = por %p186, %p187
      %p189 = scmp.le.s32.totalorder 1, %s19
      %p190 = scmp.lt.s32.totalorder %s19, 17
      %p191 = pnand %p189, %p190
      %p192 = pneg %p191
      // Predicated region
      $region9: #{tpu_custom_call.1} parent=5 // pred_check
        _
      $region10: #{tpu_custom_call.1} parent=5 // pred_check_branch
        %194 = sbr.rel (%p191) target = $region12
      $region11: #{tpu_custom_call.1} parent=5 // pred_region
        %s195 = ssub.s32 %s19, 1
        // Predicated region
        $region13: #{tpu_custom_call.1} parent=11 // pred_check
          %p196 = pneg %p66
        $region14: #{tpu_custom_call.1} parent=11 // pred_check_branch
          %198 = sbr.rel (%p196) target = $region16
        $region15: #{tpu_custom_call.1} parent=11 // pred_region
          _
        $region16: #{tpu_custom_call.1} parent=11 // pred_fallthru
          _
        // Predicated region
        $region17: #{tpu_custom_call.1} parent=11 // pred_check
          %p199 = pneg %p87
        $region18: #{tpu_custom_call.1} parent=11 // pred_check_branch
          %201 = sbr.rel (%p199) target = $region20
        $region19: #{tpu_custom_call.1} parent=11 // pred_region
          _
        $region20: #{tpu_custom_call.1} parent=11 // pred_fallthru
          _
        // Predicated region
        $region21: #{tpu_custom_call.1} parent=11 // pred_check
          %p202 = pneg %p108
        $region22: #{tpu_custom_call.1} parent=11 // pred_check_branch
          %204 = sbr.rel (%p202) target = $region24
        $region23: #{tpu_custom_call.1} parent=11 // pred_region
          _
        $region24: #{tpu_custom_call.1} parent=11 // pred_fallthru
          _
        // Predicated region
        $region25: #{tpu_custom_call.1} parent=11 // pred_check
          %p205 = pneg %p129
        $region26: #{tpu_custom_call.1} parent=11 // pred_check_branch
          %207 = sbr.rel (%p205) target = $region28
        $region27: #{tpu_custom_call.1} parent=11 // pred_region
          _
        $region28: #{tpu_custom_call.1} parent=11 // pred_fallthru
          _
      $region12: #{tpu_custom_call.1} parent=5 // pred_fallthru
        _
      %p208 = scmp.lt.s32.totalorder %s19, 16
      // Predicated region
      $region29: #{tpu_custom_call.1} parent=5 // pred_check
        %p209 = pneg %p208
      $region30: #{tpu_custom_call.1} parent=5 // pred_check_branch
        %211 = sbr.rel (%p209) target = $region32
      $region31: #{tpu_custom_call.1} parent=5 // pred_region
        // Predicated region
        $region33: #{tpu_custom_call.1} parent=31 // pred_check
          %p212 = pneg %p39
        $region34: #{tpu_custom_call.1} parent=31 // pred_check_branch
          %214 = sbr.rel (%p212) target = $region36
        $region35: #{tpu_custom_call.1} parent=31 // pred_region
          %p215 = scmp.lt.s32.totalorder %s19, 15
          %s216 = scalar_select %p215, %s19, 15
          %s217 = smul.addr %s216, 8
          %s218 = scalar_lea.vmem %s0, %s217
        $region36: #{tpu_custom_call.1} parent=31 // pred_fallthru
          _
      $region32: #{tpu_custom_call.1} parent=5 // pred_fallthru
        _
      %p219 = scmp.le.s32.totalorder 1, %s19
      %p220 = scmp.lt.s32.totalorder %s19, 17
      %p221 = pnand %p219, %p220
      %p222 = pneg %p221
      // Predicated region
      $region37: #{tpu_custom_call.1} parent=5 // pred_check
        _
      $region38: #{tpu_custom_call.1} parent=5 // pred_check_branch
        %224 = sbr.rel (%p221) target = $region40
      $region39: #{tpu_custom_call.1} parent=5 // pred_region
        %s225 = ssub.s32 %s19, 1
        %p226 = scmp.lt.s32.totalorder %s24, 15
        %s227 = scalar_select %p226, %s24, 15
        %s228 = smul.addr %s227, 8
        %s229 = scalar_lea.vmem %s0, %s228
        %p230 = pneg %p45
        %p231 = pneg %p42
        %p232 = pneg %p66
        %p233 = pneg %p63
        %p234 = pneg %p87
        %p235 = pneg %p84
        %p236 = pneg %p108
        %p237 = pneg %p105
        %p238 = pneg %p129
        %p239 = pneg %p126
        %p240 = pneg %p155
        %p241 = pneg %p152
        %s242 = sand.u32 %s142, 1
        %s243 = scalar_lea.sflag [#allocation3], %s242
        %s244 = sand.u32 %s142, 1
        %s245 = smul.addr %s244, 8
        %s246 = scalar_lea.vmem [#allocation2], %s245
        %p247 = pneg %p181
        %p248 = pneg %p178
        %s249 = sand.u32 %s168, 1
        %s250 = scalar_lea.sflag [#allocation5], %s249
        %s251 = sand.u32 %s168, 1
        %s252 = smul.addr %s251, 4
        %s253 = scalar_lea.vmem [#allocation4], %s252
        %p254 = scmp.lt.s32.totalorder %s24, 15
        %s255 = scalar_select %p254, %s24, 15
        %s256 = smul.addr %s255, 8
        %s257 = scalar_lea.vmem %s0, %s256
        %v259 = vld [vmem:[%s257] sm:$0xff]
        %v260 = vld [vmem:[%s2] sm:$0x7]
        %v261 = vpack.c.bf16 %v259, %v259
        %v262 = vld [vmem:[%s1] sm:$0xf]
        %v263 = vld [vmem:[%s1 + $0x4] sm:$0xf]
        %v264 = vld [vmem:[%s1 + $0x8] sm:$0xf]
        %v265 = vld [vmem:[%s1 + $0xc] sm:$0xf]
        %v266 = vld [vmem:[%s1 + $0x10] sm:$0xf]
        %v267 = vld [vmem:[%s1 + $0x14] sm:$0xf]
        %v268 = vlaneseq
        %v269 = vshrl.u32 %v268, 7
        %v270 = vsub.s32 0, %v269
        %v271 = vrot.slane %v260, %v270
        %v278 = vunpack.c.l.b16 %v262
        %v279 = vunpack.c.l.b16 %v263
        %v280 = vunpack.c.l.b16 %v264
        %v281 = vunpack.c.l.b16 %v265
        %v282 = vunpack.c.l.b16 %v266
        %v283 = vunpack.c.l.b16 %v267
        %v284 = vpack.c.b16 %v279, %v278
        %v285 = vpack.c.b16 %v281, %v280
        %v286 = vpack.c.b16 %v283, %v282
        %vm290 = vcmask 392192
        %v292 = vsel %vm290, %v261, 0
        %294 = vmatprep.subr.bf16.mxu0 0
        %295 = vmatpush1.bf16.msra.mxu0 %v284
        %296 = vmatprep.subr.bf16.mxu0 0
        %297 = vmatpush1.bf16.msra.mxu0 %v285
        %298 = vmatprep.subr.bf16.mxu0 0
        %299 = vmatpush1.bf16.msra.mxu0 %v286
        %300 = vmatprep.subr.bf16.mxu0 0
        %301 = vmatpush1.bf16.msra.mxu0 0
        %302 = vmatprep.subr.bf16.mxu0 0
        %303 = vmatpush1.bf16.msra.mxu0 0
        %304 = vmatprep.subr.bf16.mxu0 0
        %305 = vmatpush1.bf16.msra.mxu0 0
        %306 = vmatprep.subr.bf16.mxu0 0
        %307 = vmatpush1.bf16.msra.mxu0 0
        %308 = vmatprep.subr.bf16.mxu0 0
        %309 = vmatpush1.bf16.msra.mxu0 0
        %310 = vmatprep.subr.bf16.mxu0 0
        %311 = vmatpush1.bf16.msra.mxu0 0
        %312 = vmatprep.subr.bf16.mxu0 0
        %313 = vmatpush1.bf16.msra.mxu0 0
        %314 = vmatprep.subr.bf16.mxu0 0
        %315 = vmatpush1.bf16.msra.mxu0 0
        %316 = vmatprep.subr.bf16.mxu0 0
        %317 = vmatpush1.bf16.msra.mxu0 0
        %318 = vmatprep.subr.bf16.mxu0 0
        %319 = vmatpush1.bf16.msra.mxu0 0
        %320 = vmatprep.subr.bf16.mxu0 0
        %321 = vmatpush1.bf16.msra.mxu0 0
        %322 = vmatprep.subr.bf16.mxu0 0
        %323 = vmatpush1.bf16.msra.mxu0 0
        %324 = vmatprep.subr.bf16.mxu0 0
        %325 = vmatpush1.bf16.msra.mxu0 0
        %326 = vmatprep.mubr.bf16.mxu0 0
        %327 = vmatmul.mubr.bf16.gmra.mrb[0].mxu0 %v292
        %v328 = vpop.f32.mrb[0].mxu0
        %v329 = vadd.f32 %v271, %v328
        %v330 = vpop.f32.mrb[0].mxu0
        %v331 = vpop.f32.mrb[0].mxu0
        %v332 = vpop.f32.mrb[0].mxu0
        %333 = vdwg.mxu0
        %v334 = vsel %vm290, %v329, 0.0
        %335 = vadd.xlane.f32.xlu0 %v334
        %v336 = vpop.xlane.xlu0 %335
        %v337 = vrcp.pop 48.0
        %v338 = vmul.f32 %v336, %v337
        %v339 = vsub.f32 %v329, %v338
        %v340 = vmul.f32 %v339, %v339
        %v341 = vsel %vm290, %v340, 0.0
        %342 = vadd.xlane.f32.xlu0 %v341
        %v343 = vpop.xlane.xlu0 %342
        %v344 = vmul.f32 %v343, %v337
        %v345 = vadd.f32 %v344, 1e-05
        %v346 = vrsqrt.pop %v345
        %v347 = vmul.f32 %v339, %v346
        %v348 = vlaneseq
        %v349 = vshrl.u32 %v348, 7
        %v350 = vsub.s32 1, %v349
        %v351 = vrot.slane %v260, %v350
        %v352 = vmul.f32 %v347, %v351
        %v353 = vlaneseq
        %v354 = vshrl.u32 %v353, 7
        %v355 = vsub.s32 2, %v354
        %v356 = vrot.slane %v260, %v355
        %v357 = vadd.f32 %v352, %v356
        %v358 = vmul.f32 %v357, 0.5
        %v359 = vmul.f32 %v357, 0.044715
        %v360 = vmul.f32 %v359, %v357
        %v361 = vmul.f32 %v360, %v357
        %v362 = vadd.f32 %v357, %v361
        %v363 = vmul.f32 %v362, 0.7978846
        %v364 = vtanh.pop %v363
        %v365 = vadd.f32 %v364, 1.0
        %v366 = vmul.f32 %v358, %v365
        %v367 = vpack.c.bf16 %v366, %v366
        %v368 = vld [vmem:[%s3] sm:$0xf]
        %v369 = vld [vmem:[%s3 + $0x4] sm:$0xf]
        %v370 = vld [vmem:[%s3 + $0x8] sm:$0xf]
        %v371 = vld [vmem:[%s3 + $0xc] sm:$0xf]
        %v372 = vld [vmem:[%s3 + $0x10] sm:$0xf]
        %v373 = vld [vmem:[%s3 + $0x14] sm:$0xf]
        %v374 = vld [vmem:[%s4] sm:$0x1]
        %v376 = vlaneseq
        %v377 = vshrl.u32 %v376, 7
        %v378 = vsub.s32 0, %v377
        %v379 = vrot.slane %v374, %v378
        %v387 = vunpack.c.l.b16 %v368
        %v388 = vunpack.c.l.b16 %v369
        %v389 = vunpack.c.l.b16 %v370
        %v390 = vunpack.c.l.b16 %v371
        %v391 = vunpack.c.l.b16 %v372
        %v392 = vunpack.c.l.b16 %v373
        %v393 = vpack.c.b16 %v388, %v387
        %v394 = vpack.c.b16 %v390, %v389
        %v395 = vpack.c.b16 %v392, %v391
        %v400 = vsel %vm290, %v367, 0
        %402 = vmatprep.subr.bf16.mxu0 0
        %403 = vmatpush1.bf16.msra.mxu0 %v393
        %404 = vmatprep.subr.bf16.mxu0 0
        %405 = vmatpush1.bf16.msra.mxu0 %v394
        %406 = vmatprep.subr.bf16.mxu0 0
        %407 = vmatpush1.bf16.msra.mxu0 %v395
        %408 = vmatprep.subr.bf16.mxu0 0
        %409 = vmatpush1.bf16.msra.mxu0 0
        %410 = vmatprep.subr.bf16.mxu0 0
        %411 = vmatpush1.bf16.msra.mxu0 0
        %412 = vmatprep.subr.bf16.mxu0 0
        %413 = vmatpush1.bf16.msra.mxu0 0
        %414 = vmatprep.subr.bf16.mxu0 0
        %415 = vmatpush1.bf16.msra.mxu0 0
        %416 = vmatprep.subr.bf16.mxu0 0
        %417 = vmatpush1.bf16.msra.mxu0 0
        %418 = vmatprep.subr.bf16.mxu0 0
        %419 = vmatpush1.bf16.msra.mxu0 0
        %420 = vmatprep.subr.bf16.mxu0 0
        %421 = vmatpush1.bf16.msra.mxu0 0
        %422 = vmatprep.subr.bf16.mxu0 0
        %423 = vmatpush1.bf16.msra.mxu0 0
        %424 = vmatprep.subr.bf16.mxu0 0
        %425 = vmatpush1.bf16.msra.mxu0 0
        %426 = vmatprep.subr.bf16.mxu0 0
        %427 = vmatpush1.bf16.msra.mxu0 0
        %428 = vmatprep.subr.bf16.mxu0 0
        %429 = vmatpush1.bf16.msra.mxu0 0
        %430 = vmatprep.subr.bf16.mxu0 0
        %431 = vmatpush1.bf16.msra.mxu0 0
        %432 = vmatprep.subr.bf16.mxu0 0
        %433 = vmatpush1.bf16.msra.mxu0 0
        %434 = vmatprep.mubr.bf16.mxu0 0
        %435 = vmatmul.mubr.bf16.gmra.mrb[0].mxu0 %v400
        %v436 = vpop.f32.mrb[0].mxu0
        %v437 = vadd.f32 %v379, %v436
        %v438 = vpop.f32.mrb[0].mxu0
        %v439 = vpop.f32.mrb[0].mxu0
        %v440 = vpop.f32.mrb[0].mxu0
        %441 = vdwg.mxu0
        %442 = vst [vmem:[%s246] sm:$0xff] %v437
        %v443 = vmul.f32 %v437, %v437
        %444 = vadd.xlane.f32.xlu0 %v443
        %v445 = vpop.xlane.xlu0 %444
        %v446 = vmax.f32 %v445, 1e-24
        %v447 = vrsqrt.pop %v446
        %v448 = vmul.f32 %v437, %v447
        %v449 = vpack.c.bf16 %v448, %v448
        %450 = vst [vmem:[%s253] sm:$0xf] %v449
        %s451 = sand.u32 %s142, 1
        %s452 = scalar_lea.sflag [#allocation3], %s451
        %s453 = sand.u32 %s142, 1
        %s454 = smul.addr %s453, 8
        %s455 = scalar_lea.vmem [#allocation2], %s454
        %s456 = sand.u32 %s168, 1
        %s457 = scalar_lea.sflag [#allocation5], %s456
        %s458 = sand.u32 %s168, 1
        %s459 = smul.addr %s458, 4
        %s460 = scalar_lea.vmem [#allocation4], %s459
        // Predicated region
        $region41: #{tpu_custom_call.1} parent=39 // pred_check
          %p461 = pneg %p152
        $region42: #{tpu_custom_call.1} parent=39 // pred_check_branch
          %463 = sbr.rel (%p461) target = $region44
        $region43: #{tpu_custom_call.1} parent=39 // pred_region
          %s465 = ssub.s32 128, 128
          %466 = vsyncadd %s452, %s465
          %s467 = smul.addr %s24, 128
          %s468 = scalar_lea.hbm %s5, %s467
          %s470 = sshll.u32 %s455, 4
          %s471 = int_to_ptr.vmem [resolvable:$true] %s470
          %473 = dma.vmem_to_hbm [thread:$0]  %s471, 128, %s468, %s452
        $region44: #{tpu_custom_call.1} parent=39 // pred_fallthru
          _
        // Predicated region
        $region45: #{tpu_custom_call.1} parent=39 // pred_check
          %p474 = pneg %p178
        $region46: #{tpu_custom_call.1} parent=39 // pred_check_branch
          %476 = sbr.rel (%p474) target = $region48
        $region47: #{tpu_custom_call.1} parent=39 // pred_region
          %s478 = ssub.s32 64, 64
          %479 = vsyncadd %s457, %s478
          %s480 = smul.addr %s24, 64
          %s481 = scalar_lea.hbm %s6, %s480
          %s483 = sshll.u32 %s460, 4
          %s484 = int_to_ptr.vmem [resolvable:$true] %s483
          %486 = dma.vmem_to_hbm [thread:$0]  %s484, 64, %s481, %s457
        $region48: #{tpu_custom_call.1} parent=39 // pred_fallthru
          _
      $region40: #{tpu_custom_call.1} parent=5 // pred_fallthru
        _
      %p487 = scmp.le.s32.totalorder 2, %s19
      // Predicated region
      $region49: #{tpu_custom_call.1} parent=5 // pred_check
        %p488 = pneg %p487
      $region50: #{tpu_custom_call.1} parent=5 // pred_check_branch
        %490 = sbr.rel (%p488) target = $region52
      $region51: #{tpu_custom_call.1} parent=5 // pred_region
        %s491 = ssub.s32 %s19, 2
        // Predicated region
        $region53: #{tpu_custom_call.1} parent=51 // pred_check
          %p492 = pneg %p158
        $region54: #{tpu_custom_call.1} parent=51 // pred_check_branch
          %494 = sbr.rel (%p492) target = $region56
        $region55: #{tpu_custom_call.1} parent=51 // pred_region
          %s495 = sand.u32 %s143, 1
          %s496 = scalar_lea.sflag [#allocation3], %s495
          %s497 = sand.u32 %s143, 1
          %s498 = smul.addr %s497, 8
          %s499 = scalar_lea.vmem [#allocation2], %s498
          %500 = dma.done %s496, 128
        $region56: #{tpu_custom_call.1} parent=51 // pred_fallthru
          _
        // Predicated region
        $region57: #{tpu_custom_call.1} parent=51 // pred_check
          %p501 = pneg %p184
        $region58: #{tpu_custom_call.1} parent=51 // pred_check_branch
          %503 = sbr.rel (%p501) target = $region60
        $region59: #{tpu_custom_call.1} parent=51 // pred_region
          %s504 = sand.u32 %s169, 1
          %s505 = scalar_lea.sflag [#allocation5], %s504
          %s506 = sand.u32 %s169, 1
          %s507 = smul.addr %s506, 4
          %s508 = scalar_lea.vmem [#allocation4], %s507
          %509 = dma.done %s505, 64
        $region60: #{tpu_custom_call.1} parent=51 // pred_fallthru
          _
      $region52: #{tpu_custom_call.1} parent=5 // pred_fallthru
        _
    $region6: #{tpu_custom_call.1} parent=1 // loop_footer
      %s23 = sadd.s32 1, %s19
    $region7: #{tpu_custom_call.1} parent=1 // loop_footer_branch
      %18 = sbr.rel target = $region3
    $region8: #{tpu_custom_call.1} parent=1 // loop_exit
      _
    %510 = vsyncpa [#allocation3], 1
    %s511 = scalar_lea.sflag [#allocation3], 1
    %512 = vsyncpa %s511, 1
    %513 = vsyncpa [#allocation5], 1
    %s514 = scalar_lea.sflag [#allocation5], 1
    %515 = vsyncpa %s514, 1

// kernel: tpu_custom_call.1
$region0: #{tpu_custom_call.1}
  #allocation0 [shape = 'u32[]', space=smem, size = 0x4, offset = 0x4, fixed_abs, tag = 'smem constant byte address 0x4 - core index']
  #allocation1 [shape = 'u32[144,128]{1,0:T(1,128)}', space=vmem, size = 0x12000, scoped, tag = 'internal scratch']
  %s0 = inlined_call_operand.vmem [shape: f32[128,48], index: 0, kind: input, shape index: {}]
  %s1 = inlined_call_operand.vmem [shape: bf16[48,48], index: 1, kind: input, shape index: {}]
  %s2 = inlined_call_operand.vmem [shape: f32[3,48], index: 2, kind: input, shape index: {}]
  %s3 = inlined_call_operand.vmem [shape: bf16[48,128], index: 3, kind: input, shape index: {}]
  %s4 = inlined_call_operand.vmem [shape: f32[1,128], index: 4, kind: input, shape index: {}]
  %s5 = inlined_call_operand.hbm [shape: f32[128,128], index: 5, kind: output, shape index: {0}]
  %s6 = inlined_call_operand.hbm [shape: bf16[128,128], index: 6, kind: output, shape index: {1}]
  %7 = xla_tuple %s5, %s6
  %s8 = sld [smem:[#allocation0]]
  $region61: #{tpu_custom_call.1} parent=0
    _
  %s10 = ssub.s32 1, %s8
  %s11 = scalar_select 0, %s10, %s8
  $region1: #{tpu_custom_call.1} parent=0
    #allocation2 [shape = 'u8[8192]{0}', space=vmem, size = 0x2000, scoped, tag = 'output window, operand 0']
    #allocation3 [shape = 's32[2]{0}', space=sflag, size = 0x8, scoped, tag = 'scoped memory for tpu_custom_call.1']
    #allocation4 [shape = 'u8[4096]{0}', space=vmem, size = 0x1000, scoped, tag = 'output window, operand 1']
    #allocation5 [shape = 's32[2]{0}', space=sflag, size = 0x8, scoped, tag = 'scoped memory for tpu_custom_call.1']
    %12 = vsyncpa [#allocation3], 0
    %s13 = scalar_lea.sflag [#allocation3], 1
    %14 = vsyncpa %s13, 0
    %15 = vsyncpa [#allocation5], 0
    %s16 = scalar_lea.sflag [#allocation5], 1
    %17 = vsyncpa %s16, 0
    loop: start=0, step=1, limit=18
    $region2: #{tpu_custom_call.1} parent=1 // loop_pre_header
      _
    $region3: #{tpu_custom_call.1} parent=1 // loop_header
      %s19 = sphi 0, %s23
      %p20 = scmp.ge.s32.totalorder %s19, 18
      %s29 = sphi 0, %s31
      %s32 = sphi 0, %s29
      %s33 = sphi 0, %s32
      %s49 = sphi 0, %s33
      %s53 = sphi 0, %s53
      %s55 = sphi 0, %s53
      %s56 = sphi 0, %s55
      %s70 = sphi 0, %s56
      %s74 = sphi 0, %s74
      %s76 = sphi 0, %s74
      %s77 = sphi 0, %s76
      %s91 = sphi 0, %s77
      %s95 = sphi 0, %s95
      %s97 = sphi 0, %s95
      %s98 = sphi 0, %s97
      %s112 = sphi 0, %s98
      %s116 = sphi 0, %s116
      %s118 = sphi 0, %s116
      %s119 = sphi 0, %s118
      %s133 = sphi 0, %s119
      %s139 = sphi 0, %s141
      %s142 = sphi 0, %s139
      %s143 = sphi 0, %s142
      %s159 = sphi 0, %s143
      %s165 = sphi 0, %s167
      %s168 = sphi 0, %s165
      %s169 = sphi 0, %s168
      %s185 = sphi 0, %s169
    $region4: #{tpu_custom_call.1} parent=1 // loop_header_branch
      %22 = sbr.rel (%p20) target = $region8
    $region5: #{tpu_custom_call.1} parent=1 // loop_body
      %s24 = ssub.s32 %s19, 1
      %s25 = ssub.s32 %s19, 2
      %s26 = sadd.s32 %s19, 1
      %s27 = ssub.s32 %s19, %s26
      %p28 = scmp.eq.s32.totalorder %s27, 0
      %s30 = sadd.s32 %s29, 1
      %s31 = scalar_select %p28, %s29, %s30
      %p34 = pneg %p28
      %p35 = scmp.eq.s32.totalorder %s19, 15
      %p36 = por %p34, %p35
      %p37 = scmp.ne.s32.totalorder %s29, %s32
      %p38 = scmp.eq.s32.totalorder %s19, 0
      %p39 = por %p37, %p38
      %p40 = scmp.ne.s32.totalorder %s29, %s32
      %p41 = scmp.eq.s32.totalorder %s24, 15
      %p42 = por %p40, %p41
      %p43 = scmp.ne.s32.totalorder %s32, %s33
      %p44 = scmp.eq.s32.totalorder %s24, 0
      %p45 = por %p43, %p44
      %p46 = scmp.ne.s32.totalorder %s32, %s33
      %p47 = scmp.eq.s32.totalorder %s25, 15
      %p48 = por %p46, %p47
      %p50 = scmp.ne.s32.totalorder %s33, %s49
      %p51 = scmp.eq.s32.totalorder %s25, 0
      %p52 = por %p50, %p51
      %s54 = sadd.s32 %s53, 1
      %p57 = scmp.eq.s32.totalorder %s19, 15
      %p58 = scmp.ne.s32.totalorder %s53, %s55
      %p59 = scmp.eq.s32.totalorder %s19, 0
      %p60 = por %p58, %p59
      %p61 = scmp.ne.s32.totalorder %s53, %s55
      %p62 = scmp.eq.s32.totalorder %s24, 15
      %p63 = por %p61, %p62
      %p64 = scmp.ne.s32.totalorder %s55, %s56
      %p65 = scmp.eq.s32.totalorder %s24, 0
      %p66 = por %p64, %p65
      %p67 = scmp.ne.s32.totalorder %s55, %s56
      %p68 = scmp.eq.s32.totalorder %s25, 15
      %p69 = por %p67, %p68
      %p71 = scmp.ne.s32.totalorder %s56, %s70
      %p72 = scmp.eq.s32.totalorder %s25, 0
      %p73 = por %p71, %p72
      %s75 = sadd.s32 %s74, 1
      %p78 = scmp.eq.s32.totalorder %s19, 15
      %p79 = scmp.ne.s32.totalorder %s74, %s76
      %p80 = scmp.eq.s32.totalorder %s19, 0
      %p81 = por %p79, %p80
      %p82 = scmp.ne.s32.totalorder %s74, %s76
      %p83 = scmp.eq.s32.totalorder %s24, 15
      %p84 = por %p82, %p83
      %p85 = scmp.ne.s32.totalorder %s76, %s77
      %p86 = scmp.eq.s32.totalorder %s24, 0
      %p87 = por %p85, %p86
      %p88 = scmp.ne.s32.totalorder %s76, %s77
      %p89 = scmp.eq.s32.totalorder %s25, 15
      %p90 = por %p88, %p89
      %p92 = scmp.ne.s32.totalorder %s77, %s91
      %p93 = scmp.eq.s32.totalorder %s25, 0
      %p94 = por %p92, %p93
      %s96 = sadd.s32 %s95, 1
      %p99 = scmp.eq.s32.totalorder %s19, 15
      %p100 = scmp.ne.s32.totalorder %s95, %s97
      %p101 = scmp.eq.s32.totalorder %s19, 0
      %p102 = por %p100, %p101
      %p103 = scmp.ne.s32.totalorder %s95, %s97
      %p104 = scmp.eq.s32.totalorder %s24, 15
      %p105 = por %p103, %p104
      %p106 = scmp.ne.s32.totalorder %s97, %s98
      %p107 = scmp.eq.s32.totalorder %s24, 0
      %p108 = por %p106, %p107
      %p109 = scmp.ne.s32.totalorder %s97, %s98
      %p110 = scmp.eq.s32.totalorder %s25, 15
      %p111 = por %p109, %p110
      %p113 = scmp.ne.s32.totalorder %s98, %s112
      %p114 = scmp.eq.s32.totalorder %s25, 0
      %p115 = por %p113, %p114
      %s117 = sadd.s32 %s116, 1
      %p120 = scmp.eq.s32.totalorder %s19, 15
      %p121 = scmp.ne.s32.totalorder %s116, %s118
      %p122 = scmp.eq.s32.totalorder %s19, 0
      %p123 = por %p121, %p122
      %p124 = scmp.ne.s32.totalorder %s116, %s118
      %p125 = scmp.eq.s32.totalorder %s24, 15
      %p126 = por %p124, %p125
      %p127 = scmp.ne.s32.totalorder %s118, %s119
      %p128 = scmp.eq.s32.totalorder %s24, 0
      %p129 = por %p127, %p128
      %p130 = scmp.ne.s32.totalorder %s118, %s119
      %p131 = scmp.eq.s32.totalorder %s25, 15
      %p132 = por %p130, %p131
      %p134 = scmp.ne.s32.totalorder %s119, %s133
      %p135 = scmp.eq.s32.totalorder %s25, 0
      %p136 = por %p134, %p135
      %s137 = ssub.s32 %s19, %s26
      %p138 = scmp.eq.s32.totalorder %s137, 0
      %s140 = sadd.s32 %s139, 1
      %s141 = scalar_select %p138, %s139, %s140
      %p144 = pneg %p138
      %p145 = scmp.eq.s32.totalorder %s19, 15
      %p146 = por %p144, %p145
      %p147 = scmp.ne.s32.totalorder %s139, %s142
      %p148 = scmp.eq.s32.totalorder %s19, 0
      %p149 = por %p147, %p148
      %p150 = scmp.ne.s32.totalorder %s139, %s142
      %p151 = scmp.eq.s32.totalorder %s24, 15
      %p152 = por %p150, %p151
      %p153 = scmp.ne.s32.totalorder %s142, %s143
      %p154 = scmp.eq.s32.totalorder %s24, 0
      %p155 = por %p153, %p154
      %p156 = scmp.ne.s32.totalorder %s142, %s143
      %p157 = scmp.eq.s32.totalorder %s25, 15
      %p158 = por %p156, %p157
      %p160 = scmp.ne.s32.totalorder %s143, %s159
      %p161 = scmp.eq.s32.totalorder %s25, 0
      %p162 = por %p160, %p161
      %s163 = ssub.s32 %s19, %s26
      %p164 = scmp.eq.s32.totalorder %s163, 0
      %s166 = sadd.s32 %s165, 1
      %s167 = scalar_select %p164, %s165, %s166
      %p170 = pneg %p164
      %p171 = scmp.eq.s32.totalorder %s19, 15
      %p172 = por %p170, %p171
      %p173 = scmp.ne.s32.totalorder %s165, %s168
      %p174 = scmp.eq.s32.totalorder %s19, 0
      %p175 = por %p173, %p174
      %p176 = scmp.ne.s32.totalorder %s165, %s168
      %p177 = scmp.eq.s32.totalorder %s24, 15
      %p178 = por %p176, %p177
      %p179 = scmp.ne.s32.totalorder %s168, %s169
      %p180 = scmp.eq.s32.totalorder %s24, 0
      %p181 = por %p179, %p180
      %p182 = scmp.ne.s32.totalorder %s168, %s169
      %p183 = scmp.eq.s32.totalorder %s25, 15
      %p184 = por %p182, %p183
      %p186 = scmp.ne.s32.totalorder %s169, %s185
      %p187 = scmp.eq.s32.totalorder %s25, 0
      %p188 = por %p186, %p187
      %p189 = scmp.le.s32.totalorder 1, %s19
      %p190 = scmp.lt.s32.totalorder %s19, 17
      %p191 = pnand %p189, %p190
      %p192 = pneg %p191
      // Predicated region
      $region9: #{tpu_custom_call.1} parent=5 // pred_check
        _
      $region10: #{tpu_custom_call.1} parent=5 // pred_check_branch
        %194 = sbr.rel (%p191) target = $region12
      $region11: #{tpu_custom_call.1} parent=5 // pred_region
        %s195 = ssub.s32 %s19, 1
        // Predicated region
        $region13: #{tpu_custom_call.1} parent=11 // pred_check
          %p196 = pneg %p66
        $region14: #{tpu_custom_call.1} parent=11 // pred_check_branch
          %198 = sbr.rel (%p196) target = $region16
        $region15: #{tpu_custom_call.1} parent=11 // pred_region
          _
        $region16: #{tpu_custom_call.1} parent=11 // pred_fallthru
          _
        // Predicated region
        $region17: #{tpu_custom_call.1} parent=11 // pred_check
          %p199 = pneg %p87
        $region18: #{tpu_custom_call.1} parent=11 // pred_check_branch
          %201 = sbr.rel (%p199) target = $region20
        $region19: #{tpu_custom_call.1} parent=11 // pred_region
          _
        $region20: #{tpu_custom_call.1} parent=11 // pred_fallthru
          _
        // Predicated region
        $region21: #{tpu_custom_call.1} parent=11 // pred_check
          %p202 = pneg %p108
        $region22: #{tpu_custom_call.1} parent=11 // pred_check_branch
          %204 = sbr.rel (%p202) target = $region24
        $region23: #{tpu_custom_call.1} parent=11 // pred_region
          _
        $region24: #{tpu_custom_call.1} parent=11 // pred_fallthru
          _
        // Predicated region
        $region25: #{tpu_custom_call.1} parent=11 // pred_check
          %p205 = pneg %p129
        $region26: #{tpu_custom_call.1} parent=11 // pred_check_branch
          %207 = sbr.rel (%p205) target = $region28
        $region27: #{tpu_custom_call.1} parent=11 // pred_region
          _
        $region28: #{tpu_custom_call.1} parent=11 // pred_fallthru
          _
      $region12: #{tpu_custom_call.1} parent=5 // pred_fallthru
        _
      %p208 = scmp.lt.s32.totalorder %s19, 16
      // Predicated region
      $region29: #{tpu_custom_call.1} parent=5 // pred_check
        %p209 = pneg %p208
      $region30: #{tpu_custom_call.1} parent=5 // pred_check_branch
        %211 = sbr.rel (%p209) target = $region32
      $region31: #{tpu_custom_call.1} parent=5 // pred_region
        // Predicated region
        $region33: #{tpu_custom_call.1} parent=31 // pred_check
          %p212 = pneg %p39
        $region34: #{tpu_custom_call.1} parent=31 // pred_check_branch
          %214 = sbr.rel (%p212) target = $region36
        $region35: #{tpu_custom_call.1} parent=31 // pred_region
          %p215 = scmp.lt.s32.totalorder %s19, 15
          %s216 = scalar_select %p215, %s19, 15
          %s217 = smul.addr %s216, 8
          %s218 = scalar_lea.vmem %s0, %s217
        $region36: #{tpu_custom_call.1} parent=31 // pred_fallthru
          _
      $region32: #{tpu_custom_call.1} parent=5 // pred_fallthru
        _
      %p219 = scmp.le.s32.totalorder 1, %s19
      %p220 = scmp.lt.s32.totalorder %s19, 17
      %p221 = pnand %p219, %p220
      %p222 = pneg %p221
      // Predicated region
      $region37: #{tpu_custom_call.1} parent=5 // pred_check
        _
      $region38: #{tpu_custom_call.1} parent=5 // pred_check_branch
        %224 = sbr.rel (%p221) target = $region40
      $region39: #{tpu_custom_call.1} parent=5 // pred_region
        %s225 = ssub.s32 %s19, 1
        %p226 = scmp.lt.s32.totalorder %s24, 15
        %s227 = scalar_select %p226, %s24, 15
        %s228 = smul.addr %s227, 8
        %s229 = scalar_lea.vmem %s0, %s228
        %p230 = pneg %p45
        %p231 = pneg %p42
        %p232 = pneg %p66
        %p233 = pneg %p63
        %p234 = pneg %p87
        %p235 = pneg %p84
        %p236 = pneg %p108
        %p237 = pneg %p105
        %p238 = pneg %p129
        %p239 = pneg %p126
        %p240 = pneg %p155
        %p241 = pneg %p152
        %s242 = sand.u32 %s142, 1
        %s243 = scalar_lea.sflag [#allocation3], %s242
        %s244 = sand.u32 %s142, 1
        %s245 = smul.addr %s244, 8
        %s246 = scalar_lea.vmem [#allocation2], %s245
        %p247 = pneg %p181
        %p248 = pneg %p178
        %s249 = sand.u32 %s168, 1
        %s250 = scalar_lea.sflag [#allocation5], %s249
        %s251 = sand.u32 %s168, 1
        %s252 = smul.addr %s251, 4
        %s253 = scalar_lea.vmem [#allocation4], %s252
        %p254 = scmp.lt.s32.totalorder %s24, 15
        %s255 = scalar_select %p254, %s24, 15
        %s256 = smul.addr %s255, 8
        %s257 = scalar_lea.vmem %s0, %s256
        %v259 = vld [vmem:[%s257] sm:$0xff]
        %v260 = vld [vmem:[%s2] sm:$0x7]
        %v261 = vpack.c.bf16 %v259, %v259
        %v262 = vld [vmem:[%s1] sm:$0xf]
        %v263 = vld [vmem:[%s1 + $0x4] sm:$0xf]
        %v264 = vld [vmem:[%s1 + $0x8] sm:$0xf]
        %v265 = vld [vmem:[%s1 + $0xc] sm:$0xf]
        %v266 = vld [vmem:[%s1 + $0x10] sm:$0xf]
        %v267 = vld [vmem:[%s1 + $0x14] sm:$0xf]
        %v268 = vlaneseq
        %v269 = vshrl.u32 %v268, 7
        %v270 = vsub.s32 0, %v269
        %v271 = vrot.slane %v260, %v270
        %v278 = vunpack.c.l.b16 %v262
        %v279 = vunpack.c.l.b16 %v263
        %v280 = vunpack.c.l.b16 %v264
        %v281 = vunpack.c.l.b16 %v265
        %v282 = vunpack.c.l.b16 %v266
        %v283 = vunpack.c.l.b16 %v267
        %v284 = vpack.c.b16 %v279, %v278
        %v285 = vpack.c.b16 %v281, %v280
        %v286 = vpack.c.b16 %v283, %v282
        %vm290 = vcmask 392192
        %v292 = vsel %vm290, %v261, 0
        %294 = vmatprep.subr.bf16.mxu0 0
        %295 = vmatpush1.bf16.msra.mxu0 %v284
        %296 = vmatprep.subr.bf16.mxu0 0
        %297 = vmatpush1.bf16.msra.mxu0 %v285
        %298 = vmatprep.subr.bf16.mxu0 0
        %299 = vmatpush1.bf16.msra.mxu0 %v286
        %300 = vmatprep.subr.bf16.mxu0 0
        %301 = vmatpush1.bf16.msra.mxu0 0
        %302 = vmatprep.subr.bf16.mxu0 0
        %303 = vmatpush1.bf16.msra.mxu0 0
        %304 = vmatprep.subr.bf16.mxu0 0
        %305 = vmatpush1.bf16.msra.mxu0 0
        %306 = vmatprep.subr.bf16.mxu0 0
        %307 = vmatpush1.bf16.msra.mxu0 0
        %308 = vmatprep.subr.bf16.mxu0 0
        %309 = vmatpush1.bf16.msra.mxu0 0
        %310 = vmatprep.subr.bf16.mxu0 0
        %311 = vmatpush1.bf16.msra.mxu0 0
        %312 = vmatprep.subr.bf16.mxu0 0
        %313 = vmatpush1.bf16.msra.mxu0 0
        %314 = vmatprep.subr.bf16.mxu0 0
        %315 = vmatpush1.bf16.msra.mxu0 0
        %316 = vmatprep.subr.bf16.mxu0 0
        %317 = vmatpush1.bf16.msra.mxu0 0
        %318 = vmatprep.subr.bf16.mxu0 0
        %319 = vmatpush1.bf16.msra.mxu0 0
        %320 = vmatprep.subr.bf16.mxu0 0
        %321 = vmatpush1.bf16.msra.mxu0 0
        %322 = vmatprep.subr.bf16.mxu0 0
        %323 = vmatpush1.bf16.msra.mxu0 0
        %324 = vmatprep.subr.bf16.mxu0 0
        %325 = vmatpush1.bf16.msra.mxu0 0
        %326 = vmatprep.mubr.bf16.mxu0 0
        %327 = vmatmul.mubr.bf16.gmra.mrb[0].mxu0 %v292
        %v328 = vpop.f32.mrb[0].mxu0
        %v329 = vadd.f32 %v271, %v328
        %v330 = vpop.f32.mrb[0].mxu0
        %v331 = vpop.f32.mrb[0].mxu0
        %v332 = vpop.f32.mrb[0].mxu0
        %333 = vdwg.mxu0
        %v334 = vsel %vm290, %v329, 0.0
        %335 = vadd.xlane.f32.xlu0 %v334
        %v336 = vpop.xlane.xlu0 %335
        %v337 = vrcp.pop 48.0
        %v338 = vmul.f32 %v336, %v337
        %v339 = vsub.f32 %v329, %v338
        %v340 = vmul.f32 %v339, %v339
        %v341 = vsel %vm290, %v340, 0.0
        %342 = vadd.xlane.f32.xlu0 %v341
        %v343 = vpop.xlane.xlu0 %342
        %v344 = vmul.f32 %v343, %v337
        %v345 = vadd.f32 %v344, 1e-05
        %v346 = vrsqrt.pop %v345
        %v347 = vmul.f32 %v339, %v346
        %v348 = vlaneseq
        %v349 = vshrl.u32 %v348, 7
        %v350 = vsub.s32 1, %v349
        %v351 = vrot.slane %v260, %v350
        %v352 = vmul.f32 %v347, %v351
        %v353 = vlaneseq
        %v354 = vshrl.u32 %v353, 7
        %v355 = vsub.s32 2, %v354
        %v356 = vrot.slane %v260, %v355
        %v357 = vadd.f32 %v352, %v356
        %v358 = vmul.f32 %v357, 0.5
        %v359 = vmul.f32 %v357, 0.044715
        %v360 = vmul.f32 %v359, %v357
        %v361 = vmul.f32 %v360, %v357
        %v362 = vadd.f32 %v357, %v361
        %v363 = vmul.f32 %v362, 0.7978846
        %v364 = vtanh.pop %v363
        %v365 = vadd.f32 %v364, 1.0
        %v366 = vmul.f32 %v358, %v365
        %v367 = vpack.c.bf16 %v366, %v366
        %v368 = vld [vmem:[%s3] sm:$0xf]
        %v369 = vld [vmem:[%s3 + $0x4] sm:$0xf]
        %v370 = vld [vmem:[%s3 + $0x8] sm:$0xf]
        %v371 = vld [vmem:[%s3 + $0xc] sm:$0xf]
        %v372 = vld [vmem:[%s3 + $0x10] sm:$0xf]
        %v373 = vld [vmem:[%s3 + $0x14] sm:$0xf]
        %v374 = vld [vmem:[%s4] sm:$0x1]
        %v376 = vlaneseq
        %v377 = vshrl.u32 %v376, 7
        %v378 = vsub.s32 0, %v377
        %v379 = vrot.slane %v374, %v378
        %v387 = vunpack.c.l.b16 %v368
        %v388 = vunpack.c.l.b16 %v369
        %v389 = vunpack.c.l.b16 %v370
        %v390 = vunpack.c.l.b16 %v371
        %v391 = vunpack.c.l.b16 %v372
        %v392 = vunpack.c.l.b16 %v373
        %v393 = vpack.c.b16 %v388, %v387
        %v394 = vpack.c.b16 %v390, %v389
        %v395 = vpack.c.b16 %v392, %v391
        %v400 = vsel %vm290, %v367, 0
        %402 = vmatprep.subr.bf16.mxu0 0
        %403 = vmatpush1.bf16.msra.mxu0 %v393
        %404 = vmatprep.subr.bf16.mxu0 0
        %405 = vmatpush1.bf16.msra.mxu0 %v394
        %406 = vmatprep.subr.bf16.mxu0 0
        %407 = vmatpush1.bf16.msra.mxu0 %v395
        %408 = vmatprep.subr.bf16.mxu0 0
        %409 = vmatpush1.bf16.msra.mxu0 0
        %410 = vmatprep.subr.bf16.mxu0 0
        %411 = vmatpush1.bf16.msra.mxu0 0
        %412 = vmatprep.subr.bf16.mxu0 0
        %413 = vmatpush1.bf16.msra.mxu0 0
        %414 = vmatprep.subr.bf16.mxu0 0
        %415 = vmatpush1.bf16.msra.mxu0 0
        %416 = vmatprep.subr.bf16.mxu0 0
        %417 = vmatpush1.bf16.msra.mxu0 0
        %418 = vmatprep.subr.bf16.mxu0 0
        %419 = vmatpush1.bf16.msra.mxu0 0
        %420 = vmatprep.subr.bf16.mxu0 0
        %421 = vmatpush1.bf16.msra.mxu0 0
        %422 = vmatprep.subr.bf16.mxu0 0
        %423 = vmatpush1.bf16.msra.mxu0 0
        %424 = vmatprep.subr.bf16.mxu0 0
        %425 = vmatpush1.bf16.msra.mxu0 0
        %426 = vmatprep.subr.bf16.mxu0 0
        %427 = vmatpush1.bf16.msra.mxu0 0
        %428 = vmatprep.subr.bf16.mxu0 0
        %429 = vmatpush1.bf16.msra.mxu0 0
        %430 = vmatprep.subr.bf16.mxu0 0
        %431 = vmatpush1.bf16.msra.mxu0 0
        %432 = vmatprep.subr.bf16.mxu0 0
        %433 = vmatpush1.bf16.msra.mxu0 0
        %434 = vmatprep.mubr.bf16.mxu0 0
        %435 = vmatmul.mubr.bf16.gmra.mrb[0].mxu0 %v400
        %v436 = vpop.f32.mrb[0].mxu0
        %v437 = vadd.f32 %v379, %v436
        %v438 = vpop.f32.mrb[0].mxu0
        %v439 = vpop.f32.mrb[0].mxu0
        %v440 = vpop.f32.mrb[0].mxu0
        %441 = vdwg.mxu0
        %442 = vst [vmem:[%s246] sm:$0xff] %v437
        %v443 = vmul.f32 %v437, %v437
        %444 = vadd.xlane.f32.xlu0 %v443
        %v445 = vpop.xlane.xlu0 %444
        %v446 = vmax.f32 %v445, 1e-24
        %v447 = vrsqrt.pop %v446
        %v448 = vmul.f32 %v437, %v447
        %v449 = vpack.c.bf16 %v448, %v448
        %450 = vst [vmem:[%s253] sm:$0xf] %v449
        %s451 = sand.u32 %s142, 1
        %s452 = scalar_lea.sflag [#allocation3], %s451
        %s453 = sand.u32 %s142, 1
        %s454 = smul.addr %s453, 8
        %s455 = scalar_lea.vmem [#allocation2], %s454
        %s456 = sand.u32 %s168, 1
        %s457 = scalar_lea.sflag [#allocation5], %s456
        %s458 = sand.u32 %s168, 1
        %s459 = smul.addr %s458, 4
        %s460 = scalar_lea.vmem [#allocation4], %s459
        // Predicated region
        $region41: #{tpu_custom_call.1} parent=39 // pred_check
          %p461 = pneg %p152
        $region42: #{tpu_custom_call.1} parent=39 // pred_check_branch
          %463 = sbr.rel (%p461) target = $region44
        $region43: #{tpu_custom_call.1} parent=39 // pred_region
          %s465 = ssub.s32 128, 128
          %466 = vsyncadd %s452, %s465
          %s467 = smul.addr %s24, 128
          %s468 = scalar_lea.hbm %s5, %s467
          %s470 = sshll.u32 %s455, 4
          %s471 = int_to_ptr.vmem [resolvable:$true] %s470
          %473 = dma.vmem_to_hbm [thread:$0]  %s471, 128, %s468, %s452
        $region44: #{tpu_custom_call.1} parent=39 // pred_fallthru
          _
        // Predicated region
        $region45: #{tpu_custom_call.1} parent=39 // pred_check
          %p474 = pneg %p178
        $region46: #{tpu_custom_call.1} parent=39 // pred_check_branch
          %476 = sbr.rel (%p474) target = $region48
        $region47: #{tpu_custom_call.1} parent=39 // pred_region
          %s478 = ssub.s32 64, 64
          %479 = vsyncadd %s457, %s478
          %s480 = smul.addr %s24, 64
          %s481 = scalar_lea.hbm %s6, %s480
          %s483 = sshll.u32 %s460, 4
          %s484 = int_to_ptr.vmem [resolvable:$true] %s483
          %486 = dma.vmem_to_hbm [thread:$0]  %s484, 64, %s481, %s457
        $region48: #{tpu_custom_call.1} parent=39 // pred_fallthru
          _
      $region40: #{tpu_custom_call.1} parent=5 // pred_fallthru
        _
      %p487 = scmp.le.s32.totalorder 2, %s19
      // Predicated region
      $region49: #{tpu_custom_call.1} parent=5 // pred_check
        %p488 = pneg %p487
      $region50: #{tpu_custom_call.1} parent=5 // pred_check_branch
        %490 = sbr.rel (%p488) target = $region52
      $region51: #{tpu_custom_call.1} parent=5 // pred_region
        %s491 = ssub.s32 %s19, 2
        // Predicated region
        $region53: #{tpu_custom_call.1} parent=51 // pred_check
          %p492 = pneg %p158
        $region54: #{tpu_custom_call.1} parent=51 // pred_check_branch
          %494 = sbr.rel (%p492) target = $region56
        $region55: #{tpu_custom_call.1} parent=51 // pred_region
          %s495 = sand.u32 %s143, 1
          %s496 = scalar_lea.sflag [#allocation3], %s495
          %s497 = sand.u32 %s143, 1
          %s498 = smul.addr %s497, 8
          %s499 = scalar_lea.vmem [#allocation2], %s498
          %500 = dma.done %s496, 128
        $region56: #{tpu_custom_call.1} parent=51 // pred_fallthru
          _
        // Predicated region
        $region57: #{tpu_custom_call.1} parent=51 // pred_check
          %p501 = pneg %p184
        $region58: #{tpu_custom_call.1} parent=51 // pred_check_branch
          %503 = sbr.rel (%p501) target = $region60
        $region59: #{tpu_custom_call.1} parent=51 // pred_region
          %s504 = sand.u32 %s169, 1
          %s505 = scalar_lea.sflag [#allocation5], %s504
          %s506 = sand.u32 %s169, 1
          %s507 = smul.addr %s506, 4
          %s508 = scalar_lea.vmem [#allocation4], %s507
          %509 = dma.done %s505, 64
        $region60: #{tpu_custom_call.1} parent=51 // pred_fallthru
          _
      $region52: #{tpu_custom_call.1} parent=5 // pred_fallthru
        _
    $region6: #{tpu_custom_call.1} parent=1 // loop_footer
      %s23 = sadd.s32 1, %s19
    $region7: #{tpu_custom_call.1} parent=1 // loop_footer_branch
      %18 = sbr.rel target = $region3
    $region8: #{tpu_custom_call.1} parent=1 // loop_exit
      _
    %510 = vsyncpa [#allocation3], 1
    %s511 = scalar_lea.sflag [#allocation3], 1
    %512 = vsyncpa %s511, 1
    %513 = vsyncpa [#allocation5], 1
    %s514 = scalar_lea.sflag [#allocation5], 1
    %515 = vsyncpa %s514, 1

</llo_original>
